<compile_context>
chip_gen: v6e
topology: v6e:2x2x1
jax: 0.10.0
libtpu: 0.0.40
codegen_flags: <defaults>
</compile_context>

<pallas_src>
import math
import functools

import jax
import jax.numpy as jnp
from jax.experimental import pallas as pl
from jax.experimental.pallas import tpu as pltpu


def _mha_kernel(x_ref, qe_ref, ke_ref,
                wq_ref, wk_ref, wv_ref, wo_ref,
                b_ref, mask_ref,
                o_ref, *, num_heads):
    """One grid step: a block of Bb batch elements, full token/feature slab."""
    Bb, F_t, D = x_ref.shape
    H = num_heads
    M = Bb * F_t
    G = Bb * H

    b_all = b_ref[...]                                    # (4, D) f32

    # Flatten (Bb, F, D) -> (Bb*F, D): all three projections become single
    # well-shaped MXU GEMMs (bf16 operands, f32 accumulation).  The score
    # scale 1/sqrt(hd) is already folded into wq / b_all[0] by prepare_params.
    x2 = x_ref[...].reshape(M, D)
    qe2 = qe_ref[...].reshape(M, D)
    ke2 = ke_ref[...].reshape(M, D)

    Q = jnp.dot(qe2, wq_ref[...], preferred_element_type=jnp.float32) + b_all[0:1, :]
    K = jnp.dot(ke2, wk_ref[...], preferred_element_type=jnp.float32) + b_all[1:2, :]
    V = jnp.dot(x2, wv_ref[...], preferred_element_type=jnp.float32) + b_all[2:3, :]

    # Whole-head attention, no per-head loop and no hd-wide lane slicing:
    # mask4[0, h, 0, d] = 1 iff column d belongs to head h.  Masking K gives
    # exact per-head scores from a full-D contraction; masking V lands each
    # head's P@V output in its own column band so the head merge is a plain
    # sum over H (no concatenate / lane relayout).  All dots below are 2-D or
    # single-batch-dim einsums (well supported by Mosaic).
    mask4 = mask_ref[...]                                  # (1, H, 1, D) bf16, exact 0/1

    Q4 = Q.astype(jnp.bfloat16).reshape(Bb, 1, F_t, D)
    K4 = K.astype(jnp.bfloat16).reshape(Bb, 1, F_t, D)
    V4 = V.astype(jnp.bfloat16).reshape(Bb, 1, F_t, D)

    Qg = jnp.broadcast_to(Q4, (Bb, H, F_t, D)).reshape(G, F_t, D)
    Kg = (K4 * mask4).reshape(G, F_t, D)
    Vg = (V4 * mask4).reshape(G, F_t, D)

    # Per-head scores via full-D contraction against the masked K (the masked
    # columns contribute exact zeros to the f32 accumulator).
    s = jnp.einsum("gqd,gkd->gqk", Qg, Kg,
                   preferred_element_type=jnp.float32)     # (G, F, F)

    # Single numerically-stable softmax pass over all heads/batch elements
    # (max/exp/sum/reciprocal amortized to one push each).  Exact reciprocal:
    # attention probabilities may be inspected downstream.
    s = s - jnp.max(s, axis=-1, keepdims=True)
    p = jnp.exp(s)
    denom = jnp.sum(p, axis=-1, keepdims=True)
    p = p * pl.reciprocal(denom, approx=False)

    og = jnp.einsum("gqk,gkd->gqd", p.astype(jnp.bfloat16), Vg,
                    preferred_element_type=jnp.float32)    # (G, F, D)

    # Head merge: each head only occupies its own column band of og, so the
    # concatenated attention output is just the sum over the head axis.
    attn = og.reshape(Bb, H, F_t, D).sum(axis=1).reshape(M, D)

    # Single K=D output-projection GEMM (instead of H small K=hd GEMMs).
    out = jnp.dot(attn.astype(jnp.bfloat16), wo_ref[...],
                  preferred_element_type=jnp.float32) + b_all[3:4, :]

    o_ref[...] = out.reshape(Bb, F_t, D).astype(o_ref.dtype)


def _tpu_generation_params():
    """Return (tensorcores_per_chip, mxu_rows) for the attached TPU."""
    try:
        kind = jax.devices()[0].device_kind.lower()
    except Exception:
        return 1, 256
    num_tc = 2 if "v7" in kind else 1
    mxu_rows = 128 if any(v in kind for v in ("v2", "v3", "v4", "v5")) else 256
    return num_tc, mxu_rows


def _pick_block_b(B, F_t, *, num_tc=1, mxu_rows=256, m_cap=1024):
    """Divisor of B used as the per-step batch block."""
    divs = [d for d in range(1, B + 1) if B % d == 0]
    under_cap = [d for d in divs if d * F_t <= m_cap] or [1]
    # v7x: keep >= num_tc grid steps so the "parallel" batch axis feeds both
    # TensorCores; on 1-TC chips keep the single big block (fewer step
    # overheads dominate at small sizes).
    if num_tc > 1:
        split = [d for d in under_cap if (B // d) >= num_tc]
        under_cap = split or [min(under_cap)]
    # Prefer blocks whose flattened GEMM M dim is a multiple of the MXU height
    # (full systolic-array rows per weight load) when B allows.
    aligned = [d for d in under_cap if (d * F_t) % mxu_rows == 0]
    return max(aligned) if aligned else max(under_cap)


def prepare_params(params, *, num_heads):
    """One-time parameter preparation (hoisted out of the per-call hot path).

    params: dict with wq, bq, wk, bk, wv, bv, wo, bo.  Weights are (D_in,
    D_out); biases are (D,).  Returns bf16 weights (with 1/sqrt(hd) folded
    into wq), a stacked (4, D) f32 bias block and the (1, H, 1, D) head mask.
    """
    D = params["wq"].shape[0]
    assert D % num_heads == 0
    hd = D // num_heads
    scale = 1.0 / math.sqrt(hd)

    head_of_col = jnp.arange(D, dtype=jnp.int32) // hd                 # (D,)
    head_ids = jnp.arange(num_heads, dtype=jnp.int32)[:, None]         # (H, 1)
    head_mask = (head_of_col[None, :] == head_ids).astype(jnp.bfloat16)
    head_mask = head_mask.reshape(1, num_heads, 1, D)

    return {
        "wq": (params["wq"] * scale).astype(jnp.bfloat16),
        "wk": params["wk"].astype(jnp.bfloat16),
        "wv": params["wv"].astype(jnp.bfloat16),
        "wo": params["wo"].astype(jnp.bfloat16),
        "biases": jnp.stack([params["bq"] * scale, params["bk"],
                             params["bv"], params["bo"]],
                            axis=0).astype(jnp.float32),               # (4, D)
        "head_mask": head_mask,                                        # (1,H,1,D)
    }


def xai_guided_mha(x, Qexpl, Kexpl, prepared, *, num_heads):
    B, F_t, D = x.shape
    assert D % num_heads == 0

    # bf16 matmul operands (MXU peak path); f32 accumulation in the kernel.
    xb = x.astype(jnp.bfloat16)
    qeb = Qexpl.astype(jnp.bfloat16)
    keb = Kexpl.astype(jnp.bfloat16)

    num_tc, mxu_rows = _tpu_generation_params()
    block_b = _pick_block_b(B, F_t, num_tc=num_tc, mxu_rows=mxu_rows)
    grid = (B // block_b,)   # >= 2 "parallel" steps on v7x; 1 big step on v5e/v6e

    tok_spec = pl.BlockSpec((block_b, F_t, D), lambda b: (b, 0, 0))
    w_spec = pl.BlockSpec((D, D), lambda b: (0, 0))
    bias_spec = pl.BlockSpec((4, D), lambda b: (0, 0))
    mask_spec = pl.BlockSpec((1, num_heads, 1, D), lambda b: (0, 0, 0, 0))

    kernel = functools.partial(_mha_kernel, num_heads=num_heads)

    return pl.pallas_call(
        kernel,
        out_shape=jax.ShapeDtypeStruct((B, F_t, D), x.dtype),
        grid_spec=pltpu.PrefetchScalarGridSpec(
            num_scalar_prefetch=0,
            grid=grid,
            in_specs=[tok_spec, tok_spec, tok_spec,
                      w_spec, w_spec, w_spec, w_spec,
                      bias_spec, mask_spec],
            out_specs=tok_spec,
        ),
        compiler_params=pltpu.CompilerParams(
            dimension_semantics=("parallel",),
            # Fits v7x's 32 MiB scoped default; re-derive block sizes against
            # 64 MiB physical when F_tokens / D scale up (see TODOs).
            vmem_limit_bytes=32 * 1024 * 1024),
    )(xb, qeb, keb,
      prepared["wq"], prepared["wk"], prepared["wv"], prepared["wo"],
      prepared["biases"], prepared["head_mask"])


def xai_guided_mha_forward(x, Qexpl, Kexpl, fl, fu, age, gender, prepared, *,
                           num_heads):
    """Mirrors XAIGuidedMultiheadAttention.forward.  fl/fu/age/gender are only
    consumed by drofe_fn, which is None in this configuration."""
    del fl, fu, age, gender   # TODO(synk): route through drofe_fn on Q/K if supplied
    return xai_guided_mha(x, Qexpl, Kexpl, prepared, num_heads=num_heads)


def _reference(x, Qexpl, Kexpl, params, *, num_heads):
    """Plain-JAX f32 reference reproducing the PyTorch forward."""
    B, F_t, D = x.shape
    hd = D // num_heads

    def lin(a, w, b):
        return a @ w + b

    Q = lin(Qexpl, params["wq"], params["bq"])
    K = lin(Kexpl, params["wk"], params["bk"])
    V = lin(x, params["wv"], params["bv"])

    def split(t):  # (B, F, D) -> (B, H, F, hd)
        return t.reshape(B, F_t, num_heads, hd).transpose(0, 2, 1, 3)

    Qh, Kh, Vh = split(Q), split(K), split(V)
    scores = jnp.einsum("bhqd,bhkd->bhqk", Qh, Kh) / math.sqrt(hd)
    w = jax.nn.softmax(scores, axis=-1)
    out = jnp.einsum("bhqk,bhkd->bhqd", w, Vh)
    out = out.transpose(0, 2, 1, 3).reshape(B, F_t, D)
    return lin(out, params["wo"], params["bo"])


if __name__ == "__main__":
    B, F_tokens, D = 2, 8, 32
    num_heads = 4

    key = jax.random.PRNGKey(0)
    keys = jax.random.split(key, 16)

    # Deterministic synthetic parameters (PyTorch Linear: weight (out,in), bias
    # (out,)); stored here already transposed to (in, out) for y = x @ W + b.
    def mk_w(k):
        return jax.random.normal(k, (D, D), dtype=jnp.float32) / math.sqrt(D)

    def mk_b(k):
        return jax.random.normal(k, (D,), dtype=jnp.float32) * 0.01

    params = {
        "wq": mk_w(keys[0]), "bq": mk_b(keys[1]),
        "wk": mk_w(keys[2]), "bk": mk_b(keys[3]),
        "wv": mk_w(keys[4]), "bv": mk_b(keys[5]),
        "wo": mk_w(keys[6]), "bo": mk_b(keys[7]),
    }

    x = jax.random.normal(keys[8], (B, F_tokens, D), dtype=jnp.float32)
    Qexpl = jax.random.normal(keys[9], (B, F_tokens, D), dtype=jnp.float32)
    Kexpl = jax.random.normal(keys[10], (B, F_tokens, D), dtype=jnp.float32)

    # fl, fu, age, gender are only consumed by drofe_fn, which is None here.
    fl = jnp.ones((B, F_tokens), dtype=jnp.float32)
    fu = jnp.ones((B, F_tokens), dtype=jnp.float32)
    age = jnp.ones((B,), dtype=jnp.float32)
    gender = jnp.zeros((B,), dtype=jnp.int32)

    # One-time parameter preparation (scale fold, bf16 casts, bias stack, mask).
    prepared = prepare_params(params, num_heads=num_heads)
    prepared = jax.tree_util.tree_map(jax.block_until_ready, prepared)

    out = xai_guided_mha_forward(x, Qexpl, Kexpl, fl, fu, age, gender,
                                 prepared, num_heads=num_heads)
    out = jax.block_until_ready(out)

    ref = _reference(x, Qexpl, Kexpl, params, num_heads=num_heads)
    assert out.shape == (B, F_tokens, D)
    # bf16 matmul operands (f32 accumulation) => loosened tolerance vs f32 ref.
    assert jnp.allclose(out, ref, atol=5e-2, rtol=5e-2), "mismatch vs reference"

    print("KERNEL_OK")
</pallas_src>

<mosaic_0001>
module attributes {stable_mosaic.version = 11 : i64} {
  func.func @_mha_kernel(%arg0: i32, %arg1: memref<2x8x32xbf16, #tpu.memory_space<vmem>>, %arg2: memref<2x8x32xbf16, #tpu.memory_space<vmem>>, %arg3: memref<2x8x32xbf16, #tpu.memory_space<vmem>>, %arg4: memref<32x32xbf16, #tpu.memory_space<vmem>>, %arg5: memref<32x32xbf16, #tpu.memory_space<vmem>>, %arg6: memref<32x32xbf16, #tpu.memory_space<vmem>>, %arg7: memref<32x32xbf16, #tpu.memory_space<vmem>>, %arg8: memref<4x32xf32, #tpu.memory_space<vmem>>, %arg9: memref<1x4x1x32xbf16, #tpu.memory_space<vmem>>, %arg10: memref<2x8x32xf32, #tpu.memory_space<vmem>>) attributes {dimension_semantics = [#tpu.dimension_semantics<parallel>], iteration_bounds = array<i64: 1>, scalar_prefetch = 0 : i64, scratch_operands = 0 : i64, tpu.core_type = #tpu.core_type<tc>, window_params = [{transform_indices = @transform_0, window_bounds = array<i64: 2, 8, 32>}, {transform_indices = @transform_1, window_bounds = array<i64: 2, 8, 32>}, {transform_indices = @transform_2, window_bounds = array<i64: 2, 8, 32>}, {pipeline_mode = #tpu.pipeline_mode<synchronous>, transform_indices = @transform_3, window_bounds = array<i64: 32, 32>}, {pipeline_mode = #tpu.pipeline_mode<synchronous>, transform_indices = @transform_4, window_bounds = array<i64: 32, 32>}, {pipeline_mode = #tpu.pipeline_mode<synchronous>, transform_indices = @transform_5, window_bounds = array<i64: 32, 32>}, {pipeline_mode = #tpu.pipeline_mode<synchronous>, transform_indices = @transform_6, window_bounds = array<i64: 32, 32>}, {pipeline_mode = #tpu.pipeline_mode<synchronous>, transform_indices = @transform_7, window_bounds = array<i64: 4, 32>}, {pipeline_mode = #tpu.pipeline_mode<synchronous>, transform_indices = @transform_8, window_bounds = array<i64: 1, 4, 1, 32>}, {transform_indices = @transform_9, window_bounds = array<i64: 2, 8, 32>}]} {
    %c0 = arith.constant 0 : index
    %c0_0 = arith.constant 0 : index
    %0 = vector.load %arg8[%c0, %c0_0] : memref<4x32xf32, #tpu.memory_space<vmem>>, vector<4x32xf32>
    %c0_1 = arith.constant 0 : index
    %c0_2 = arith.constant 0 : index
    %c0_3 = arith.constant 0 : index
    %1 = vector.load %arg1[%c0_1, %c0_2, %c0_3] : memref<2x8x32xbf16, #tpu.memory_space<vmem>>, vector<2x8x32xbf16>
    %2 = vector.shape_cast %1 : vector<2x8x32xbf16> to vector<16x32xbf16>
    %c0_4 = arith.constant 0 : index
    %c0_5 = arith.constant 0 : index
    %c0_6 = arith.constant 0 : index
    %3 = vector.load %arg2[%c0_4, %c0_5, %c0_6] : memref<2x8x32xbf16, #tpu.memory_space<vmem>>, vector<2x8x32xbf16>
    %4 = vector.shape_cast %3 : vector<2x8x32xbf16> to vector<16x32xbf16>
    %c0_7 = arith.constant 0 : index
    %c0_8 = arith.constant 0 : index
    %c0_9 = arith.constant 0 : index
    %5 = vector.load %arg3[%c0_7, %c0_8, %c0_9] : memref<2x8x32xbf16, #tpu.memory_space<vmem>>, vector<2x8x32xbf16>
    %6 = vector.shape_cast %5 : vector<2x8x32xbf16> to vector<16x32xbf16>
    %c0_10 = arith.constant 0 : index
    %c0_11 = arith.constant 0 : index
    %7 = vector.load %arg4[%c0_10, %c0_11] : memref<32x32xbf16, #tpu.memory_space<vmem>>, vector<32x32xbf16>
    %cst = arith.constant dense<0.000000e+00> : vector<16x32xf32>
    %8 = tpu.matmul %4, %7, %cst {dimension_numbers = #tpu.dot_dimension_numbers<[1], [0], [0], [1], [0, 0, 1, 1], [], []>} : vector<16x32xbf16>, vector<32x32xbf16>, vector<16x32xf32> -> vector<16x32xf32>
    %9 = vector.extract_strided_slice %0 {offsets = [0, 0], sizes = [1, 32], strides = [1, 1]} : vector<4x32xf32> to vector<1x32xf32>
    %10 = vector.broadcast %9 : vector<1x32xf32> to vector<16x32xf32>
    %11 = arith.addf %8, %10 : vector<16x32xf32>
    %c0_12 = arith.constant 0 : index
    %c0_13 = arith.constant 0 : index
    %12 = vector.load %arg5[%c0_12, %c0_13] : memref<32x32xbf16, #tpu.memory_space<vmem>>, vector<32x32xbf16>
    %cst_14 = arith.constant dense<0.000000e+00> : vector<16x32xf32>
    %13 = tpu.matmul %6, %12, %cst_14 {dimension_numbers = #tpu.dot_dimension_numbers<[1], [0], [0], [1], [0, 0, 1, 1], [], []>} : vector<16x32xbf16>, vector<32x32xbf16>, vector<16x32xf32> -> vector<16x32xf32>
    %14 = vector.extract_strided_slice %0 {offsets = [1, 0], sizes = [1, 32], strides = [1, 1]} : vector<4x32xf32> to vector<1x32xf32>
    %15 = vector.broadcast %14 : vector<1x32xf32> to vector<16x32xf32>
    %16 = arith.addf %13, %15 : vector<16x32xf32>
    %c0_15 = arith.constant 0 : index
    %c0_16 = arith.constant 0 : index
    %17 = vector.load %arg6[%c0_15, %c0_16] : memref<32x32xbf16, #tpu.memory_space<vmem>>, vector<32x32xbf16>
    %cst_17 = arith.constant dense<0.000000e+00> : vector<16x32xf32>
    %18 = tpu.matmul %2, %17, %cst_17 {dimension_numbers = #tpu.dot_dimension_numbers<[1], [0], [0], [1], [0, 0, 1, 1], [], []>} : vector<16x32xbf16>, vector<32x32xbf16>, vector<16x32xf32> -> vector<16x32xf32>
    %19 = vector.extract_strided_slice %0 {offsets = [2, 0], sizes = [1, 32], strides = [1, 1]} : vector<4x32xf32> to vector<1x32xf32>
    %20 = vector.broadcast %19 : vector<1x32xf32> to vector<16x32xf32>
    %21 = arith.addf %18, %20 : vector<16x32xf32>
    %c0_18 = arith.constant 0 : index
    %c0_19 = arith.constant 0 : index
    %c0_20 = arith.constant 0 : index
    %c0_21 = arith.constant 0 : index
    %22 = vector.load %arg9[%c0_18, %c0_19, %c0_20, %c0_21] : memref<1x4x1x32xbf16, #tpu.memory_space<vmem>>, vector<1x4x1x32xbf16>
    %23 = arith.truncf %11 : vector<16x32xf32> to vector<16x32xbf16>
    %24 = vector.shape_cast %23 : vector<16x32xbf16> to vector<2x1x8x32xbf16>
    %25 = arith.truncf %16 : vector<16x32xf32> to vector<16x32xbf16>
    %26 = vector.shape_cast %25 : vector<16x32xbf16> to vector<2x1x8x32xbf16>
    %27 = arith.truncf %21 : vector<16x32xf32> to vector<16x32xbf16>
    %28 = vector.shape_cast %27 : vector<16x32xbf16> to vector<2x1x8x32xbf16>
    %29 = vector.shape_cast %24 : vector<2x1x8x32xbf16> to vector<2x1x8x32xbf16>
    %30 = vector.broadcast %29 : vector<2x1x8x32xbf16> to vector<2x4x8x32xbf16>
    %31 = vector.shape_cast %30 : vector<2x4x8x32xbf16> to vector<8x8x32xbf16>
    %32 = vector.broadcast %26 : vector<2x1x8x32xbf16> to vector<2x4x8x32xbf16>
    %33 = vector.broadcast %22 : vector<1x4x1x32xbf16> to vector<2x4x8x32xbf16>
    %34 = arith.mulf %32, %33 : vector<2x4x8x32xbf16>
    %35 = vector.shape_cast %34 : vector<2x4x8x32xbf16> to vector<8x8x32xbf16>
    %36 = vector.broadcast %28 : vector<2x1x8x32xbf16> to vector<2x4x8x32xbf16>
    %37 = vector.broadcast %22 : vector<1x4x1x32xbf16> to vector<2x4x8x32xbf16>
    %38 = arith.mulf %36, %37 : vector<2x4x8x32xbf16>
    %39 = vector.shape_cast %38 : vector<2x4x8x32xbf16> to vector<8x8x32xbf16>
    "tpu.trace_start"() <{level = 10 : i32, message = "gqd,gkd->gqk"}> : () -> ()
    %cst_22 = arith.constant dense<0.000000e+00> : vector<8x8x8xf32>
    %40 = tpu.matmul %31, %35, %cst_22 {dimension_numbers = #tpu.dot_dimension_numbers<[2], [2], [1], [1], [0, 0, 0, 1, 1, 1], [0], [0]>} : vector<8x8x32xbf16>, vector<8x8x32xbf16>, vector<8x8x8xf32> -> vector<8x8x8xf32>
    "tpu.trace_stop"() : () -> ()
    %cst_23 = arith.constant dense<0xFF800000> : vector<8x8xf32>
    %41 = vector.multi_reduction <maximumf>, %40, %cst_23 [2] : vector<8x8x8xf32> to vector<8x8xf32>
    %42 = vector.shape_cast %41 : vector<8x8xf32> to vector<8x8x1xf32>
    %43 = vector.broadcast %42 : vector<8x8x1xf32> to vector<8x8x8xf32>
    %44 = arith.subf %40, %43 : vector<8x8x8xf32>
    %45 = math.exp %44 : vector<8x8x8xf32>
    %cst_24 = arith.constant dense<0.000000e+00> : vector<8x8xf32>
    %46 = vector.multi_reduction <add>, %45, %cst_24 [2] : vector<8x8x8xf32> to vector<8x8xf32>
    %47 = vector.shape_cast %46 : vector<8x8xf32> to vector<8x8x1xf32>
    %48 = tpu.reciprocal %47 : vector<8x8x1xf32> -> vector<8x8x1xf32>
    %49 = vector.broadcast %48 : vector<8x8x1xf32> to vector<8x8x8xf32>
    %50 = arith.mulf %45, %49 : vector<8x8x8xf32>
    %51 = arith.truncf %50 : vector<8x8x8xf32> to vector<8x8x8xbf16>
    "tpu.trace_start"() <{level = 10 : i32, message = "gqk,gkd->gqd"}> : () -> ()
    %cst_25 = arith.constant dense<0.000000e+00> : vector<8x8x32xf32>
    %52 = tpu.matmul %51, %39, %cst_25 {dimension_numbers = #tpu.dot_dimension_numbers<[2], [1], [1], [2], [0, 0, 0, 1, 1, 2], [0], [0]>} : vector<8x8x8xbf16>, vector<8x8x32xbf16>, vector<8x8x32xf32> -> vector<8x8x32xf32>
    "tpu.trace_stop"() : () -> ()
    %53 = vector.shape_cast %52 : vector<8x8x32xf32> to vector<2x4x8x32xf32>
    %cst_26 = arith.constant dense<0.000000e+00> : vector<2x8x32xf32>
    %54 = vector.multi_reduction <add>, %53, %cst_26 [1] : vector<2x4x8x32xf32> to vector<2x8x32xf32>
    %55 = vector.shape_cast %54 : vector<2x8x32xf32> to vector<16x32xf32>
    %56 = arith.truncf %55 : vector<16x32xf32> to vector<16x32xbf16>
    %c0_27 = arith.constant 0 : index
    %c0_28 = arith.constant 0 : index
    %57 = vector.load %arg7[%c0_27, %c0_28] : memref<32x32xbf16, #tpu.memory_space<vmem>>, vector<32x32xbf16>
    %cst_29 = arith.constant dense<0.000000e+00> : vector<16x32xf32>
    %58 = tpu.matmul %56, %57, %cst_29 {dimension_numbers = #tpu.dot_dimension_numbers<[1], [0], [0], [1], [0, 0, 1, 1], [], []>} : vector<16x32xbf16>, vector<32x32xbf16>, vector<16x32xf32> -> vector<16x32xf32>
    %59 = vector.extract_strided_slice %0 {offsets = [3, 0], sizes = [1, 32], strides = [1, 1]} : vector<4x32xf32> to vector<1x32xf32>
    %60 = vector.broadcast %59 : vector<1x32xf32> to vector<16x32xf32>
    %61 = arith.addf %58, %60 : vector<16x32xf32>
    %62 = vector.shape_cast %61 : vector<16x32xf32> to vector<2x8x32xf32>
    %c0_30 = arith.constant 0 : index
    %c0_31 = arith.constant 0 : index
    %c0_32 = arith.constant 0 : index
    %63 = vector.load %arg10[%c0_30, %c0_31, %c0_32] : memref<2x8x32xf32, #tpu.memory_space<vmem>>, vector<2x8x32xf32>
    tpu.vector_store %arg10[%c0_30, %c0_31, %c0_32], %62 {strides = array<i32>} : memref<2x8x32xf32, #tpu.memory_space<vmem>>, vector<2x8x32xf32>,
    return
  }
  func.func @transform_0(%arg0: i32) -> (i32, i32, i32) {
    %c0_i32 = arith.constant 0 : i32
    %c0_i32_0 = arith.constant 0 : i32
    %c0_i32_1 = arith.constant 0 : i32
    return %arg0, %c0_i32, %c0_i32_0 : i32, i32, i32
  }
  func.func @transform_1(%arg0: i32) -> (i32, i32, i32) {
    %c0_i32 = arith.constant 0 : i32
    %c0_i32_0 = arith.constant 0 : i32
    %c0_i32_1 = arith.constant 0 : i32
    return %arg0, %c0_i32, %c0_i32_0 : i32, i32, i32
  }
  func.func @transform_2(%arg0: i32) -> (i32, i32, i32) {
    %c0_i32 = arith.constant 0 : i32
    %c0_i32_0 = arith.constant 0 : i32
    %c0_i32_1 = arith.constant 0 : i32
    return %arg0, %c0_i32, %c0_i32_0 : i32, i32, i32
  }
  func.func @transform_3(%arg0: i32) -> (i32, i32) {
    %c0_i32 = arith.constant 0 : i32
    %c0_i32_0 = arith.constant 0 : i32
    %c0_i32_1 = arith.constant 0 : i32
    return %c0_i32, %c0_i32_0 : i32, i32
  }
  func.func @transform_4(%arg0: i32) -> (i32, i32) {
    %c0_i32 = arith.constant 0 : i32
    %c0_i32_0 = arith.constant 0 : i32
    %c0_i32_1 = arith.constant 0 : i32
    return %c0_i32, %c0_i32_0 : i32, i32
  }
  func.func @transform_5(%arg0: i32) -> (i32, i32) {
    %c0_i32 = arith.constant 0 : i32
    %c0_i32_0 = arith.constant 0 : i32
    %c0_i32_1 = arith.constant 0 : i32
    return %c0_i32, %c0_i32_0 : i32, i32
  }
  func.func @transform_6(%arg0: i32) -> (i32, i32) {
    %c0_i32 = arith.constant 0 : i32
    %c0_i32_0 = arith.constant 0 : i32
    %c0_i32_1 = arith.constant 0 : i32
    return %c0_i32, %c0_i32_0 : i32, i32
  }
  func.func @transform_7(%arg0: i32) -> (i32, i32) {
    %c0_i32 = arith.constant 0 : i32
    %c0_i32_0 = arith.constant 0 : i32
    %c0_i32_1 = arith.constant 0 : i32
    return %c0_i32, %c0_i32_0 : i32, i32
  }
  func.func @transform_8(%arg0: i32) -> (i32, i32, i32, i32) {
    %c0_i32 = arith.constant 0 : i32
    %c0_i32_0 = arith.constant 0 : i32
    %c0_i32_1 = arith.constant 0 : i32
    %c0_i32_2 = arith.constant 0 : i32
    %c0_i32_3 = arith.constant 0 : i32
    return %c0_i32, %c0_i32_0, %c0_i32_1, %c0_i32_2 : i32, i32, i32, i32
  }
  func.func @transform_9(%arg0: i32) -> (i32, i32, i32) {
    %c0_i32 = arith.constant 0 : i32
    %c0_i32_0 = arith.constant 0 : i32
    %c0_i32_1 = arith.constant 0 : i32
    return %arg0, %c0_i32, %c0_i32_0 : i32, i32, i32
  }
}

</mosaic_0001>

<llo_original>
// kernel: tpu_custom_call.1
$region0: #{tpu_custom_call.1}
  #allocation0 [shape = 'u32[]', space=smem, size = 0x4, offset = 0x4, fixed_abs, tag = 'smem constant byte address 0x4 - core index']
  #allocation1 [shape = 'u32[144,128]{1,0:T(1,128)}', space=vmem, size = 0x12000, scoped, tag = 'internal scratch']
  %s0 = inlined_call_operand.hbm [shape: bf16[2,8,32], index: 0, kind: input, shape index: {}]
  %s1 = inlined_call_operand.hbm [shape: bf16[2,8,32], index: 1, kind: input, shape index: {}]
  %s2 = inlined_call_operand.hbm [shape: bf16[2,8,32], index: 2, kind: input, shape index: {}]
  %s3 = inlined_call_operand.hbm [shape: bf16[32,32], index: 3, kind: input, shape index: {}]
  %s4 = inlined_call_operand.hbm [shape: bf16[32,32], index: 4, kind: input, shape index: {}]
  %s5 = inlined_call_operand.hbm [shape: bf16[32,32], index: 5, kind: input, shape index: {}]
  %s6 = inlined_call_operand.vmem [shape: bf16[32,32], index: 6, kind: input, shape index: {}]
  %s7 = inlined_call_operand.hbm [shape: f32[4,32], index: 7, kind: input, shape index: {}]
  %s8 = inlined_call_operand.vmem [shape: bf16[1,4,1,32], index: 8, kind: input, shape index: {}]
  %s9 = inlined_call_operand.hbm [shape: f32[2,8,32], index: 9, kind: output, shape index: {}]
  %s10 = sld [smem:[#allocation0]]
  $region74: #{tpu_custom_call.1} parent=0
    _
  %s12 = ssub.s32 1, %s10
  %s13 = scalar_select 0, %s12, %s10
  $region1: #{tpu_custom_call.1} parent=0
    #allocation2 [shape = 'u8[4096]{0}', space=vmem, size = 0x1000, scoped, tag = 'input window, operand 0, single buffered']
    #allocation3 [shape = 's32[1]{0}', space=sflag, size = 0x4, scoped, tag = 'scoped memory for tpu_custom_call.1']
    #allocation4 [shape = 's32[1]{0}', space=sflag, size = 0x4, scoped, tag = 'scoped memory for tpu_custom_call.1']
    #allocation5 [shape = 'u8[4096]{0}', space=vmem, size = 0x1000, scoped, tag = 'input window, operand 1, single buffered']
    #allocation6 [shape = 's32[1]{0}', space=sflag, size = 0x4, scoped, tag = 'scoped memory for tpu_custom_call.1']
    #allocation7 [shape = 'u8[4096]{0}', space=vmem, size = 0x1000, scoped, tag = 'input window, operand 2, single buffered']
    #allocation8 [shape = 'u8[8192]{0}', space=vmem, size = 0x2000, scoped, tag = 'input window, operand 3, single buffered']
    #allocation9 [shape = 's32[1]{0}', space=sflag, size = 0x4, scoped, tag = 'scoped memory for tpu_custom_call.1']
    #allocation10 [shape = 'u8[8192]{0}', space=vmem, size = 0x2000, scoped, tag = 'input window, operand 4, single buffered']
    #allocation11 [shape = 'u8[8192]{0}', space=vmem, size = 0x2000, scoped, tag = 'input window, operand 5, single buffered']
    #allocation12 [shape = 's32[1]{0}', space=sflag, size = 0x4, scoped, tag = 'scoped memory for tpu_custom_call.1']
    #allocation13 [shape = 'u8[2048]{0}', space=vmem, size = 0x800, scoped, tag = 'input window, operand 7, single buffered']
    #allocation14 [shape = 'u8[8192]{0}', space=vmem, size = 0x2000, scoped, tag = 'output window, operand 0, single buffered']
    %14 = vsyncpa [#allocation3], 0
    %15 = vsyncpa [#allocation6], 0
    %16 = vsyncpa [#allocation9], 0
    %17 = vsyncpa [#allocation12], 0
    %18 = vsyncpa [#allocation4], 0
    // Predicated region
    $region2: #{tpu_custom_call.1} parent=1 // pred_check
      _
    $region3: #{tpu_custom_call.1} parent=1 // pred_check_branch
      %20 = sbr.rel (0) target = $region5
    $region4: #{tpu_custom_call.1} parent=1 // pred_region
      %s22 = ssub.s32 128, 128
      %23 = vsyncadd [#allocation3], %s22
      %s24 = sshll.u32 [#allocation2], 4
      %s25 = int_to_ptr.vmem [resolvable:$true] %s24
      %30 = dma.hbm_to_vmem [thread:$0]  %s0, 128, %s25, [#allocation3], 64, 64, 4
    $region5: #{tpu_custom_call.1} parent=1 // pred_fallthru
      _
    // Predicated region
    $region6: #{tpu_custom_call.1} parent=1 // pred_check
      _
    $region7: #{tpu_custom_call.1} parent=1 // pred_check_branch
      %32 = sbr.rel (0) target = $region9
    $region8: #{tpu_custom_call.1} parent=1 // pred_region
      %s34 = ssub.s32 128, 128
      %35 = vsyncadd [#allocation6], %s34
      %s36 = sshll.u32 [#allocation5], 4
      %s37 = int_to_ptr.vmem [resolvable:$true] %s36
      %42 = dma.hbm_to_vmem [thread:$0]  %s1, 128, %s37, [#allocation6], 64, 64, 4
    $region9: #{tpu_custom_call.1} parent=1 // pred_fallthru
      _
    // Predicated region
    $region10: #{tpu_custom_call.1} parent=1 // pred_check
      _
    $region11: #{tpu_custom_call.1} parent=1 // pred_check_branch
      %44 = sbr.rel (0) target = $region13
    $region12: #{tpu_custom_call.1} parent=1 // pred_region
      %s46 = ssub.s32 128, 128
      %47 = vsyncadd [#allocation6], %s46
      %s48 = sshll.u32 [#allocation7], 4
      %s49 = int_to_ptr.vmem [resolvable:$true] %s48
      %54 = dma.hbm_to_vmem [thread:$0]  %s2, 128, %s49, [#allocation6], 64, 64, 4
    $region13: #{tpu_custom_call.1} parent=1 // pred_fallthru
      _
    // Predicated region
    $region14: #{tpu_custom_call.1} parent=1 // pred_check
      _
    $region15: #{tpu_custom_call.1} parent=1 // pred_check_branch
      %56 = sbr.rel (0) target = $region17
    $region16: #{tpu_custom_call.1} parent=1 // pred_region
      %s58 = ssub.s32 256, 256
      %59 = vsyncadd [#allocation9], %s58
      %s60 = sshll.u32 [#allocation8], 4
      %s61 = int_to_ptr.vmem [resolvable:$true] %s60
      %66 = dma.hbm_to_vmem [thread:$0]  %s3, 256, %s61, [#allocation9], 64, 64, 4
    $region17: #{tpu_custom_call.1} parent=1 // pred_fallthru
      _
    // Predicated region
    $region18: #{tpu_custom_call.1} parent=1 // pred_check
      _
    $region19: #{tpu_custom_call.1} parent=1 // pred_check_branch
      %68 = sbr.rel (0) target = $region21
    $region20: #{tpu_custom_call.1} parent=1 // pred_region
      %s70 = ssub.s32 256, 256
      %71 = vsyncadd [#allocation9], %s70
      %s72 = sshll.u32 [#allocation10], 4
      %s73 = int_to_ptr.vmem [resolvable:$true] %s72
      %78 = dma.hbm_to_vmem [thread:$0]  %s4, 256, %s73, [#allocation9], 64, 64, 4
    $region21: #{tpu_custom_call.1} parent=1 // pred_fallthru
      _
    // Predicated region
    $region22: #{tpu_custom_call.1} parent=1 // pred_check
      _
    $region23: #{tpu_custom_call.1} parent=1 // pred_check_branch
      %80 = sbr.rel (0) target = $region25
    $region24: #{tpu_custom_call.1} parent=1 // pred_region
      %s82 = ssub.s32 256, 256
      %83 = vsyncadd [#allocation12], %s82
      %s84 = sshll.u32 [#allocation11], 4
      %s85 = int_to_ptr.vmem [resolvable:$true] %s84
      %90 = dma.hbm_to_vmem [thread:$0]  %s5, 256, %s85, [#allocation12], 64, 64, 4
    $region25: #{tpu_custom_call.1} parent=1 // pred_fallthru
      _
    // Predicated region
    $region26: #{tpu_custom_call.1} parent=1 // pred_check
      _
    $region27: #{tpu_custom_call.1} parent=1 // pred_check_branch
      %92 = sbr.rel (0) target = $region29
    $region28: #{tpu_custom_call.1} parent=1 // pred_region
      _
    $region29: #{tpu_custom_call.1} parent=1 // pred_fallthru
      _
    // Predicated region
    $region30: #{tpu_custom_call.1} parent=1 // pred_check
      _
    $region31: #{tpu_custom_call.1} parent=1 // pred_check_branch
      %94 = sbr.rel (0) target = $region33
    $region32: #{tpu_custom_call.1} parent=1 // pred_region
      %s96 = ssub.s32 64, 64
      %97 = vsyncadd [#allocation12], %s96
      %s99 = sshll.u32 [#allocation13], 4
      %s100 = int_to_ptr.vmem [resolvable:$true] %s99
      %102 = dma.hbm_to_vmem [thread:$0]  %s7, 64, %s100, [#allocation12]
    $region33: #{tpu_custom_call.1} parent=1 // pred_fallthru
      _
    // Predicated region
    $region34: #{tpu_custom_call.1} parent=1 // pred_check
      _
    $region35: #{tpu_custom_call.1} parent=1 // pred_check_branch
      %104 = sbr.rel (0) target = $region37
    $region36: #{tpu_custom_call.1} parent=1 // pred_region
      _
    $region37: #{tpu_custom_call.1} parent=1 // pred_fallthru
      _
    // Predicated region
    $region38: #{tpu_custom_call.1} parent=1 // pred_check
      _
    $region39: #{tpu_custom_call.1} parent=1 // pred_check_branch
      %106 = sbr.rel (0) target = $region41
    $region40: #{tpu_custom_call.1} parent=1 // pred_region
      %107 = dma.done [#allocation3], 128
    $region41: #{tpu_custom_call.1} parent=1 // pred_fallthru
      _
    // Predicated region
    $region42: #{tpu_custom_call.1} parent=1 // pred_check
      _
    $region43: #{tpu_custom_call.1} parent=1 // pred_check_branch
      %109 = sbr.rel (0) target = $region45
    $region44: #{tpu_custom_call.1} parent=1 // pred_region
      %110 = dma.done [#allocation6], 128
    $region45: #{tpu_custom_call.1} parent=1 // pred_fallthru
      _
    // Predicated region
    $region46: #{tpu_custom_call.1} parent=1 // pred_check
      _
    $region47: #{tpu_custom_call.1} parent=1 // pred_check_branch
      %112 = sbr.rel (0) target = $region49
    $region48: #{tpu_custom_call.1} parent=1 // pred_region
      %113 = dma.done [#allocation6], 128
    $region49: #{tpu_custom_call.1} parent=1 // pred_fallthru
      _
    // Predicated region
    $region50: #{tpu_custom_call.1} parent=1 // pred_check
      _
    $region51: #{tpu_custom_call.1} parent=1 // pred_check_branch
      %115 = sbr.rel (0) target = $region53
    $region52: #{tpu_custom_call.1} parent=1 // pred_region
      %116 = dma.done [#allocation9], 256
    $region53: #{tpu_custom_call.1} parent=1 // pred_fallthru
      _
    // Predicated region
    $region54: #{tpu_custom_call.1} parent=1 // pred_check
      _
    $region55: #{tpu_custom_call.1} parent=1 // pred_check_branch
      %118 = sbr.rel (0) target = $region57
    $region56: #{tpu_custom_call.1} parent=1 // pred_region
      %119 = dma.done [#allocation9], 256
    $region57: #{tpu_custom_call.1} parent=1 // pred_fallthru
      _
    // Predicated region
    $region58: #{tpu_custom_call.1} parent=1 // pred_check
      _
    $region59: #{tpu_custom_call.1} parent=1 // pred_check_branch
      %121 = sbr.rel (0) target = $region61
    $region60: #{tpu_custom_call.1} parent=1 // pred_region
      %122 = dma.done [#allocation12], 256
    $region61: #{tpu_custom_call.1} parent=1 // pred_fallthru
      _
    // Predicated region
    $region62: #{tpu_custom_call.1} parent=1 // pred_check
      _
    $region63: #{tpu_custom_call.1} parent=1 // pred_check_branch
      %124 = sbr.rel (0) target = $region65
    $region64: #{tpu_custom_call.1} parent=1 // pred_region
      %125 = dma.done [#allocation12], 64
    $region65: #{tpu_custom_call.1} parent=1 // pred_fallthru
      _
    %v127 = vld [vmem:[#allocation13] sm:$0xf]
    %v128 = vld [vmem:[#allocation2] sm:$0xf]
    %v129 = vld [vmem:[#allocation2 + $0x4] sm:$0xf]
    %v130 = vld [vmem:[#allocation5] sm:$0xf]
    %v131 = vld [vmem:[#allocation5 + $0x4] sm:$0xf]
    %v132 = vld [vmem:[#allocation7] sm:$0xf]
    %v133 = vld [vmem:[#allocation7 + $0x4] sm:$0xf]
    %v134 = vld [vmem:[#allocation8] sm:$0xf]
    %v135 = vld [vmem:[#allocation8 + $0x4] sm:$0xf]
    %v136 = vld [vmem:[#allocation8 + $0x8] sm:$0xf]
    %v137 = vld [vmem:[#allocation8 + $0xc] sm:$0xf]
    %v138 = vlaneseq
    %v139 = vshrl.u32 %v138, 7
    %v140 = vsub.s32 0, %v139
    %v141 = vrot.slane %v127, %v140
    %v144 = vunpack.c.l.b16 %v130
    %v145 = vunpack.c.l.b16 %v131
    %v146 = vpack.c.b16 %v145, %v144
    %v151 = vunpack.c.l.b16 %v134
    %v152 = vunpack.c.l.b16 %v135
    %v153 = vunpack.c.l.b16 %v136
    %v154 = vunpack.c.l.b16 %v137
    %v155 = vpack.c.b16 %v152, %v151
    %v156 = vpack.c.b16 %v154, %v153
    %vm159 = vcmask 261120
    %v161 = vsel %vm159, %v146, 0
    %163 = vmatprep.subr.bf16.mxu0 0
    %164 = vmatpush1.bf16.msra.mxu0 0
    %165 = vmatprep.subr.bf16.mxu0 0
    %166 = vmatpush1.bf16.msra.mxu0 0
    %167 = vmatprep.subr.bf16.mxu0 0
    %168 = vmatpush1.bf16.msra.mxu0 0
    %169 = vmatprep.subr.bf16.mxu0 0
    %170 = vmatpush1.bf16.msra.mxu0 0
    %171 = vmatprep.subr.bf16.mxu0 0
    %172 = vmatpush1.bf16.msra.mxu0 0
    %173 = vmatprep.subr.bf16.mxu0 0
    %174 = vmatpush1.bf16.msra.mxu0 0
    %175 = vmatprep.subr.bf16.mxu0 0
    %176 = vmatpush1.bf16.msra.mxu0 %v156
    %177 = vmatprep.subr.bf16.mxu0 0
    %178 = vmatpush1.bf16.msra.mxu0 %v155
    %179 = vmatprep.subr.bf16.mxu0 0
    %180 = vmatpush2.bf16.msra.mxu0 0
    %181 = vmatprep.subr.bf16.mxu0 0
    %182 = vmatpush2.bf16.msra.mxu0 0
    %183 = vmatprep.subr.bf16.mxu0 0
    %184 = vmatpush2.bf16.msra.mxu0 0
    %185 = vmatprep.subr.bf16.mxu0 0
    %186 = vmatpush2.bf16.msra.mxu0 0
    %187 = vmatprep.subr.bf16.mxu0 0
    %188 = vmatpush2.bf16.msra.mxu0 0
    %189 = vmatprep.subr.bf16.mxu0 0
    %190 = vmatpush2.bf16.msra.mxu0 0
    %191 = vmatprep.subr.bf16.mxu0 0
    %192 = vmatpush2.bf16.msra.mxu0 0
    %193 = vmatprep.subr.bf16.mxu0 0
    %194 = vmatpush2.bf16.msra.mxu0 0
    %195 = vmatprep.mubr.bf16.mxu0 0
    %196 = vmatmul.mubr.bf16.gmra.mxu0 %v161
    %v197 = vpop.f32.mrf.mxu0
    %v198 = vadd.f32 %v141, %v197
    %v199 = vpop.f32.mrf.mxu0
    %v200 = vpop.f32.mrf.mxu0
    %v201 = vadd.f32 %v141, %v200
    %v202 = vpop.f32.mrf.mxu0
    %203 = vdwg.mxu0
    %v204 = vld [vmem:[#allocation10] sm:$0xf]
    %v205 = vld [vmem:[#allocation10 + $0x4] sm:$0xf]
    %v206 = vld [vmem:[#allocation10 + $0x8] sm:$0xf]
    %v207 = vld [vmem:[#allocation10 + $0xc] sm:$0xf]
    %v208 = vlaneseq
    %v209 = vshrl.u32 %v208, 7
    %v210 = vsub.s32 1, %v209
    %v211 = vrot.slane %v127, %v210
    %v214 = vunpack.c.l.b16 %v132
    %v215 = vunpack.c.l.b16 %v133
    %v216 = vpack.c.b16 %v215, %v214
    %v221 = vunpack.c.l.b16 %v204
    %v222 = vunpack.c.l.b16 %v205
    %v223 = vunpack.c.l.b16 %v206
    %v224 = vunpack.c.l.b16 %v207
    %v225 = vpack.c.b16 %v222, %v221
    %v226 = vpack.c.b16 %v224, %v223
    %v230 = vsel %vm159, %v216, 0
    %232 = vmatprep.subr.bf16.mxu0 0
    %233 = vmatpush1.bf16.msra.mxu0 0
    %234 = vmatprep.subr.bf16.mxu0 0
    %235 = vmatpush1.bf16.msra.mxu0 0
    %236 = vmatprep.subr.bf16.mxu0 0
    %237 = vmatpush1.bf16.msra.mxu0 0
    %238 = vmatprep.subr.bf16.mxu0 0
    %239 = vmatpush1.bf16.msra.mxu0 0
    %240 = vmatprep.subr.bf16.mxu0 0
    %241 = vmatpush1.bf16.msra.mxu0 0
    %242 = vmatprep.subr.bf16.mxu0 0
    %243 = vmatpush1.bf16.msra.mxu0 0
    %244 = vmatprep.subr.bf16.mxu0 0
    %245 = vmatpush1.bf16.msra.mxu0 %v226
    %246 = vmatprep.subr.bf16.mxu0 0
    %247 = vmatpush1.bf16.msra.mxu0 %v225
    %248 = vmatprep.subr.bf16.mxu0 0
    %249 = vmatpush2.bf16.msra.mxu0 0
    %250 = vmatprep.subr.bf16.mxu0 0
    %251 = vmatpush2.bf16.msra.mxu0 0
    %252 = vmatprep.subr.bf16.mxu0 0
    %253 = vmatpush2.bf16.msra.mxu0 0
    %254 = vmatprep.subr.bf16.mxu0 0
    %255 = vmatpush2.bf16.msra.mxu0 0
    %256 = vmatprep.subr.bf16.mxu0 0
    %257 = vmatpush2.bf16.msra.mxu0 0
    %258 = vmatprep.subr.bf16.mxu0 0
    %259 = vmatpush2.bf16.msra.mxu0 0
    %260 = vmatprep.subr.bf16.mxu0 0
    %261 = vmatpush2.bf16.msra.mxu0 0
    %262 = vmatprep.subr.bf16.mxu0 0
    %263 = vmatpush2.bf16.msra.mxu0 0
    %264 = vmatprep.mubr.bf16.mxu0 0
    %265 = vmatmul.mubr.bf16.gmra.mxu0 %v230
    %v266 = vpop.f32.mrf.mxu0
    %v267 = vadd.f32 %v211, %v266
    %v268 = vpop.f32.mrf.mxu0
    %v269 = vpop.f32.mrf.mxu0
    %v270 = vadd.f32 %v211, %v269
    %v271 = vpop.f32.mrf.mxu0
    %272 = vdwg.mxu0
    %v273 = vld [vmem:[#allocation11] sm:$0xf]
    %v274 = vld [vmem:[#allocation11 + $0x4] sm:$0xf]
    %v275 = vld [vmem:[#allocation11 + $0x8] sm:$0xf]
    %v276 = vld [vmem:[#allocation11 + $0xc] sm:$0xf]
    %v277 = vlaneseq
    %v278 = vshrl.u32 %v277, 7
    %v279 = vsub.s32 2, %v278
    %v280 = vrot.slane %v127, %v279
    %v283 = vunpack.c.l.b16 %v128
    %v284 = vunpack.c.l.b16 %v129
    %v285 = vpack.c.b16 %v284, %v283
    %v290 = vunpack.c.l.b16 %v273
    %v291 = vunpack.c.l.b16 %v274
    %v292 = vunpack.c.l.b16 %v275
    %v293 = vunpack.c.l.b16 %v276
    %v294 = vpack.c.b16 %v291, %v290
    %v295 = vpack.c.b16 %v293, %v292
    %v299 = vsel %vm159, %v285, 0
    %301 = vmatprep.subr.bf16.mxu0 0
    %302 = vmatpush1.bf16.msra.mxu0 0
    %303 = vmatprep.subr.bf16.mxu0 0
    %304 = vmatpush1.bf16.msra.mxu0 0
    %305 = vmatprep.subr.bf16.mxu0 0
    %306 = vmatpush1.bf16.msra.mxu0 0
    %307 = vmatprep.subr.bf16.mxu0 0
    %308 = vmatpush1.bf16.msra.mxu0 0
    %309 = vmatprep.subr.bf16.mxu0 0
    %310 = vmatpush1.bf16.msra.mxu0 0
    %311 = vmatprep.subr.bf16.mxu0 0
    %312 = vmatpush1.bf16.msra.mxu0 0
    %313 = vmatprep.subr.bf16.mxu0 0
    %314 = vmatpush1.bf16.msra.mxu0 %v295
    %315 = vmatprep.subr.bf16.mxu0 0
    %316 = vmatpush1.bf16.msra.mxu0 %v294
    %317 = vmatprep.subr.bf16.mxu0 0
    %318 = vmatpush2.bf16.msra.mxu0 0
    %319 = vmatprep.subr.bf16.mxu0 0
    %320 = vmatpush2.bf16.msra.mxu0 0
    %321 = vmatprep.subr.bf16.mxu0 0
    %322 = vmatpush2.bf16.msra.mxu0 0
    %323 = vmatprep.subr.bf16.mxu0 0
    %324 = vmatpush2.bf16.msra.mxu0 0
    %325 = vmatprep.subr.bf16.mxu0 0
    %326 = vmatpush2.bf16.msra.mxu0 0
    %327 = vmatprep.subr.bf16.mxu0 0
    %328 = vmatpush2.bf16.msra.mxu0 0
    %329 = vmatprep.subr.bf16.mxu0 0
    %330 = vmatpush2.bf16.msra.mxu0 0
    %331 = vmatprep.subr.bf16.mxu0 0
    %332 = vmatpush2.bf16.msra.mxu0 0
    %333 = vmatprep.mubr.bf16.mxu0 0
    %334 = vmatmul.mubr.bf16.gmra.mxu0 %v299
    %v335 = vpop.f32.mrf.mxu0
    %v336 = vadd.f32 %v280, %v335
    %v337 = vpop.f32.mrf.mxu0
    %v338 = vpop.f32.mrf.mxu0
    %v339 = vadd.f32 %v280, %v338
    %v340 = vpop.f32.mrf.mxu0
    %341 = vdwg.mxu0
    %v342 = vld [vmem:[%s8] sm:$0x1]
    %v343 = vld [vmem:[%s8 + $0x1] sm:$0x1]
    %v344 = vld [vmem:[%s8 + $0x2] sm:$0x1]
    %v345 = vld [vmem:[%s8 + $0x3] sm:$0x1]
    %v346 = vpack.c.bf16 %v201, %v198
    %v348 = vunpack.c.l.b16 %v346
    %v349 = vunpack.c.h.b16 %v346
    %v350 = vpack.c.b16 %v348, %v348
    %v351 = vpack.c.b16 %v349, %v349
    %v352 = vpack.c.bf16 %v270, %v267
    %v354 = vunpack.c.l.b16 %v352
    %v355 = vunpack.c.h.b16 %v352
    %v356 = vpack.c.b16 %v354, %v354
    %v357 = vpack.c.b16 %v355, %v355
    %v360 = vpack.c.bf16 %v339, %v336
    %v362 = vunpack.c.l.b16 %v360
    %v363 = vunpack.c.h.b16 %v360
    %v364 = vpack.c.b16 %v362, %v362
    %v365 = vpack.c.b16 %v363, %v363
    %v369 = vpack.i.b16 %v342, %v342
    %v371 = vlaneseq
    %v372 = vshrl.u32 %v371, 7
    %v373 = vsub.s32 0, %v372
    %v374 = vrot.slane %v369, %v373
    %v376 = vpack.i.b16 %v343, %v343
    %v378 = vlaneseq
    %v379 = vshrl.u32 %v378, 7
    %v380 = vsub.s32 0, %v379
    %v381 = vrot.slane %v376, %v380
    %v383 = vpack.i.b16 %v344, %v344
    %v385 = vlaneseq
    %v386 = vshrl.u32 %v385, 7
    %v387 = vsub.s32 0, %v386
    %v388 = vrot.slane %v383, %v387
    %v390 = vpack.i.b16 %v345, %v345
    %v392 = vlaneseq
    %v393 = vshrl.u32 %v392, 7
    %v394 = vsub.s32 0, %v393
    %v395 = vrot.slane %v390, %v394
    %v396 = vmul.bf16 %v356, %v374
    %v397 = vmul.bf16 %v356, %v381
    %v398 = vmul.bf16 %v356, %v388
    %v399 = vmul.bf16 %v356, %v395
    %v400 = vmul.bf16 %v357, %v374
    %v401 = vmul.bf16 %v357, %v381
    %v402 = vmul.bf16 %v357, %v388
    %v403 = vmul.bf16 %v357, %v395
    %v404 = vmul.bf16 %v364, %v374
    %v405 = vmul.bf16 %v364, %v381
    %v406 = vmul.bf16 %v364, %v388
    %v407 = vmul.bf16 %v364, %v395
    %v408 = vmul.bf16 %v365, %v374
    %v409 = vmul.bf16 %v365, %v381
    %v410 = vmul.bf16 %v365, %v388
    %v411 = vmul.bf16 %v365, %v395
    %v413 = vsel %vm159, %v350, 0
    %v416 = vsel %vm159, %v396, 0
    %418 = vmatprep.subr.bf16.mxu0 0
    %419 = vmatpush1.bf16.xpose.msra.mxu0 0
    %420 = vmatprep.subr.bf16.mxu0 0
    %421 = vmatpush1.bf16.xpose.msra.mxu0 0
    %422 = vmatprep.subr.bf16.mxu0 0
    %423 = vmatpush1.bf16.xpose.msra.mxu0 0
    %424 = vmatprep.subr.bf16.mxu0 0
    %425 = vmatpush1.bf16.xpose.msra.mxu0 0
    %426 = vmatprep.subr.bf16.mxu0 0
    %427 = vmatpush1.bf16.xpose.msra.mxu0 0
    %428 = vmatprep.subr.bf16.mxu0 0
    %429 = vmatpush1.bf16.xpose.msra.mxu0 0
    %430 = vmatprep.subr.bf16.mxu0 0
    %431 = vmatpush1.bf16.xpose.msra.mxu0 0
    %432 = vmatprep.subr.bf16.mxu0 0
    %433 = vmatpush1.bf16.xpose.msra.mxu0 %v416
    %434 = vmatprep.subr.bf16.mxu0 0
    %435 = vmatpush2.bf16.xpose.msra.mxu0 0
    %436 = vmatprep.subr.bf16.mxu0 0
    %437 = vmatpush2.bf16.xpose.msra.mxu0 0
    %438 = vmatprep.subr.bf16.mxu0 0
    %439 = vmatpush2.bf16.xpose.msra.mxu0 0
    %440 = vmatprep.subr.bf16.mxu0 0
    %441 = vmatpush2.bf16.xpose.msra.mxu0 0
    %442 = vmatprep.subr.bf16.mxu0 0
    %443 = vmatpush2.bf16.xpose.msra.mxu0 0
    %444 = vmatprep.subr.bf16.mxu0 0
    %445 = vmatpush2.bf16.xpose.msra.mxu0 0
    %446 = vmatprep.subr.bf16.mxu0 0
    %447 = vmatpush2.bf16.xpose.msra.mxu0 0
    %448 = vmatprep.subr.bf16.mxu0 0
    %449 = vmatpush2.bf16.xpose.msra.mxu0 0
    %450 = vmatprep.mubr.bf16.mxu0 0
    %451 = vmatmul.mubr.bf16.gmra.mxu0 %v413
    %v452 = vpop.f32.mrf.mxu0
    %v453 = vadd.f32 0.0, %v452
    %v454 = vpop.f32.mrf.mxu0
    %v455 = vpop.f32.mrf.mxu0
    %v456 = vpop.f32.mrf.mxu0
    %457 = vdwg.mxu0
    %v459 = vsel %vm159, %v397, 0
    %461 = vmatprep.subr.bf16.mxu0 0
    %462 = vmatpush1.bf16.xpose.msra.mxu0 0
    %463 = vmatprep.subr.bf16.mxu0 0
    %464 = vmatpush1.bf16.xpose.msra.mxu0 0
    %465 = vmatprep.subr.bf16.mxu0 0
    %466 = vmatpush1.bf16.xpose.msra.mxu0 0
    %467 = vmatprep.subr.bf16.mxu0 0
    %468 = vmatpush1.bf16.xpose.msra.mxu0 0
    %469 = vmatprep.subr.bf16.mxu0 0
    %470 = vmatpush1.bf16.xpose.msra.mxu0 0
    %471 = vmatprep.subr.bf16.mxu0 0
    %472 = vmatpush1.bf16.xpose.msra.mxu0 0
    %473 = vmatprep.subr.bf16.mxu0 0
    %474 = vmatpush1.bf16.xpose.msra.mxu0 0
    %475 = vmatprep.subr.bf16.mxu0 0
    %476 = vmatpush1.bf16.xpose.msra.mxu0 %v459
    %477 = vmatprep.subr.bf16.mxu0 0
    %478 = vmatpush2.bf16.xpose.msra.mxu0 0
    %479 = vmatprep.subr.bf16.mxu0 0
    %480 = vmatpush2.bf16.xpose.msra.mxu0 0
    %481 = vmatprep.subr.bf16.mxu0 0
    %482 = vmatpush2.bf16.xpose.msra.mxu0 0
    %483 = vmatprep.subr.bf16.mxu0 0
    %484 = vmatpush2.bf16.xpose.msra.mxu0 0
    %485 = vmatprep.subr.bf16.mxu0 0
    %486 = vmatpush2.bf16.xpose.msra.mxu0 0
    %487 = vmatprep.subr.bf16.mxu0 0
    %488 = vmatpush2.bf16.xpose.msra.mxu0 0
    %489 = vmatprep.subr.bf16.mxu0 0
    %490 = vmatpush2.bf16.xpose.msra.mxu0 0
    %491 = vmatprep.subr.bf16.mxu0 0
    %492 = vmatpush2.bf16.xpose.msra.mxu0 0
    %493 = vmatprep.mubr.bf16.mxu0 0
    %494 = vmatmul.mubr.bf16.gmra.mxu0 %v413
    %v495 = vpop.f32.mrf.mxu0
    %v496 = vadd.f32 0.0, %v495
    %v497 = vpop.f32.mrf.mxu0
    %v498 = vpop.f32.mrf.mxu0
    %v499 = vpop.f32.mrf.mxu0
    %500 = vdwg.mxu0
    %v502 = vsel %vm159, %v398, 0
    %504 = vmatprep.subr.bf16.mxu0 0
    %505 = vmatpush1.bf16.xpose.msra.mxu0 0
    %506 = vmatprep.subr.bf16.mxu0 0
    %507 = vmatpush1.bf16.xpose.msra.mxu0 0
    %508 = vmatprep.subr.bf16.mxu0 0
    %509 = vmatpush1.bf16.xpose.msra.mxu0 0
    %510 = vmatprep.subr.bf16.mxu0 0
    %511 = vmatpush1.bf16.xpose.msra.mxu0 0
    %512 = vmatprep.subr.bf16.mxu0 0
    %513 = vmatpush1.bf16.xpose.msra.mxu0 0
    %514 = vmatprep.subr.bf16.mxu0 0
    %515 = vmatpush1.bf16.xpose.msra.mxu0 0
    %516 = vmatprep.subr.bf16.mxu0 0
    %517 = vmatpush1.bf16.xpose.msra.mxu0 0
    %518 = vmatprep.subr.bf16.mxu0 0
    %519 = vmatpush1.bf16.xpose.msra.mxu0 %v502
    %520 = vmatprep.subr.bf16.mxu0 0
    %521 = vmatpush2.bf16.xpose.msra.mxu0 0
    %522 = vmatprep.subr.bf16.mxu0 0
    %523 = vmatpush2.bf16.xpose.msra.mxu0 0
    %524 = vmatprep.subr.bf16.mxu0 0
    %525 = vmatpush2.bf16.xpose.msra.mxu0 0
    %526 = vmatprep.subr.bf16.mxu0 0
    %527 = vmatpush2.bf16.xpose.msra.mxu0 0
    %528 = vmatprep.subr.bf16.mxu0 0
    %529 = vmatpush2.bf16.xpose.msra.mxu0 0
    %530 = vmatprep.subr.bf16.mxu0 0
    %531 = vmatpush2.bf16.xpose.msra.mxu0 0
    %532 = vmatprep.subr.bf16.mxu0 0
    %533 = vmatpush2.bf16.xpose.msra.mxu0 0
    %534 = vmatprep.subr.bf16.mxu0 0
    %535 = vmatpush2.bf16.xpose.msra.mxu0 0
    %536 = vmatprep.mubr.bf16.mxu0 0
    %537 = vmatmul.mubr.bf16.gmra.mxu0 %v413
    %v538 = vpop.f32.mrf.mxu0
    %v539 = vadd.f32 0.0, %v538
    %v540 = vpop.f32.mrf.mxu0
    %v541 = vpop.f32.mrf.mxu0
    %v542 = vpop.f32.mrf.mxu0
    %543 = vdwg.mxu0
    %v545 = vsel %vm159, %v399, 0
    %547 = vmatprep.subr.bf16.mxu0 0
    %548 = vmatpush1.bf16.xpose.msra.mxu0 0
    %549 = vmatprep.subr.bf16.mxu0 0
    %550 = vmatpush1.bf16.xpose.msra.mxu0 0
    %551 = vmatprep.subr.bf16.mxu0 0
    %552 = vmatpush1.bf16.xpose.msra.mxu0 0
    %553 = vmatprep.subr.bf16.mxu0 0
    %554 = vmatpush1.bf16.xpose.msra.mxu0 0
    %555 = vmatprep.subr.bf16.mxu0 0
    %556 = vmatpush1.bf16.xpose.msra.mxu0 0
    %557 = vmatprep.subr.bf16.mxu0 0
    %558 = vmatpush1.bf16.xpose.msra.mxu0 0
    %559 = vmatprep.subr.bf16.mxu0 0
    %560 = vmatpush1.bf16.xpose.msra.mxu0 0
    %561 = vmatprep.subr.bf16.mxu0 0
    %562 = vmatpush1.bf16.xpose.msra.mxu0 %v545
    %563 = vmatprep.subr.bf16.mxu0 0
    %564 = vmatpush2.bf16.xpose.msra.mxu0 0
    %565 = vmatprep.subr.bf16.mxu0 0
    %566 = vmatpush2.bf16.xpose.msra.mxu0 0
    %567 = vmatprep.subr.bf16.mxu0 0
    %568 = vmatpush2.bf16.xpose.msra.mxu0 0
    %569 = vmatprep.subr.bf16.mxu0 0
    %570 = vmatpush2.bf16.xpose.msra.mxu0 0
    %571 = vmatprep.subr.bf16.mxu0 0
    %572 = vmatpush2.bf16.xpose.msra.mxu0 0
    %573 = vmatprep.subr.bf16.mxu0 0
    %574 = vmatpush2.bf16.xpose.msra.mxu0 0
    %575 = vmatprep.subr.bf16.mxu0 0
    %576 = vmatpush2.bf16.xpose.msra.mxu0 0
    %577 = vmatprep.subr.bf16.mxu0 0
    %578 = vmatpush2.bf16.xpose.msra.mxu0 0
    %579 = vmatprep.mubr.bf16.mxu0 0
    %580 = vmatmul.mubr.bf16.gmra.mxu0 %v413
    %v581 = vpop.f32.mrf.mxu0
    %v582 = vadd.f32 0.0, %v581
    %v583 = vpop.f32.mrf.mxu0
    %v584 = vpop.f32.mrf.mxu0
    %v585 = vpop.f32.mrf.mxu0
    %586 = vdwg.mxu0
    %v588 = vsel %vm159, %v351, 0
    %v591 = vsel %vm159, %v400, 0
    %593 = vmatprep.subr.bf16.mxu0 0
    %594 = vmatpush1.bf16.xpose.msra.mxu0 0
    %595 = vmatprep.subr.bf16.mxu0 0
    %596 = vmatpush1.bf16.xpose.msra.mxu0 0
    %597 = vmatprep.subr.bf16.mxu0 0
    %598 = vmatpush1.bf16.xpose.msra.mxu0 0
    %599 = vmatprep.subr.bf16.mxu0 0
    %600 = vmatpush1.bf16.xpose.msra.mxu0 0
    %601 = vmatprep.subr.bf16.mxu0 0
    %602 = vmatpush1.bf16.xpose.msra.mxu0 0
    %603 = vmatprep.subr.bf16.mxu0 0
    %604 = vmatpush1.bf16.xpose.msra.mxu0 0
    %605 = vmatprep.subr.bf16.mxu0 0
    %606 = vmatpush1.bf16.xpose.msra.mxu0 0
    %607 = vmatprep.subr.bf16.mxu0 0
    %608 = vmatpush1.bf16.xpose.msra.mxu0 %v591
    %609 = vmatprep.subr.bf16.mxu0 0
    %610 = vmatpush2.bf16.xpose.msra.mxu0 0
    %611 = vmatprep.subr.bf16.mxu0 0
    %612 = vmatpush2.bf16.xpose.msra.mxu0 0
    %613 = vmatprep.subr.bf16.mxu0 0
    %614 = vmatpush2.bf16.xpose.msra.mxu0 0
    %615 = vmatprep.subr.bf16.mxu0 0
    %616 = vmatpush2.bf16.xpose.msra.mxu0 0
    %617 = vmatprep.subr.bf16.mxu0 0
    %618 = vmatpush2.bf16.xpose.msra.mxu0 0
    %619 = vmatprep.subr.bf16.mxu0 0
    %620 = vmatpush2.bf16.xpose.msra.mxu0 0
    %621 = vmatprep.subr.bf16.mxu0 0
    %622 = vmatpush2.bf16.xpose.msra.mxu0 0
    %623 = vmatprep.subr.bf16.mxu0 0
    %624 = vmatpush2.bf16.xpose.msra.mxu0 0
    %625 = vmatprep.mubr.bf16.mxu0 0
    %626 = vmatmul.mubr.bf16.gmra.mxu0 %v588
    %v627 = vpop.f32.mrf.mxu0
    %v628 = vadd.f32 0.0, %v627
    %v629 = vpop.f32.mrf.mxu0
    %v630 = vpop.f32.mrf.mxu0
    %v631 = vpop.f32.mrf.mxu0
    %632 = vdwg.mxu0
    %v634 = vsel %vm159, %v401, 0
    %636 = vmatprep.subr.bf16.mxu0 0
    %637 = vmatpush1.bf16.xpose.msra.mxu0 0
    %638 = vmatprep.subr.bf16.mxu0 0
    %639 = vmatpush1.bf16.xpose.msra.mxu0 0
    %640 = vmatprep.subr.bf16.mxu0 0
    %641 = vmatpush1.bf16.xpose.msra.mxu0 0
    %642 = vmatprep.subr.bf16.mxu0 0
    %643 = vmatpush1.bf16.xpose.msra.mxu0 0
    %644 = vmatprep.subr.bf16.mxu0 0
    %645 = vmatpush1.bf16.xpose.msra.mxu0 0
    %646 = vmatprep.subr.bf16.mxu0 0
    %647 = vmatpush1.bf16.xpose.msra.mxu0 0
    %648 = vmatprep.subr.bf16.mxu0 0
    %649 = vmatpush1.bf16.xpose.msra.mxu0 0
    %650 = vmatprep.subr.bf16.mxu0 0
    %651 = vmatpush1.bf16.xpose.msra.mxu0 %v634
    %652 = vmatprep.subr.bf16.mxu0 0
    %653 = vmatpush2.bf16.xpose.msra.mxu0 0
    %654 = vmatprep.subr.bf16.mxu0 0
    %655 = vmatpush2.bf16.xpose.msra.mxu0 0
    %656 = vmatprep.subr.bf16.mxu0 0
    %657 = vmatpush2.bf16.xpose.msra.mxu0 0
    %658 = vmatprep.subr.bf16.mxu0 0
    %659 = vmatpush2.bf16.xpose.msra.mxu0 0
    %660 = vmatprep.subr.bf16.mxu0 0
    %661 = vmatpush2.bf16.xpose.msra.mxu0 0
    %662 = vmatprep.subr.bf16.mxu0 0
    %663 = vmatpush2.bf16.xpose.msra.mxu0 0
    %664 = vmatprep.subr.bf16.mxu0 0
    %665 = vmatpush2.bf16.xpose.msra.mxu0 0
    %666 = vmatprep.subr.bf16.mxu0 0
    %667 = vmatpush2.bf16.xpose.msra.mxu0 0
    %668 = vmatprep.mubr.bf16.mxu0 0
    %669 = vmatmul.mubr.bf16.gmra.mxu0 %v588
    %v670 = vpop.f32.mrf.mxu0
    %v671 = vadd.f32 0.0, %v670
    %v672 = vpop.f32.mrf.mxu0
    %v673 = vpop.f32.mrf.mxu0
    %v674 = vpop.f32.mrf.mxu0
    %675 = vdwg.mxu0
    %v677 = vsel %vm159, %v402, 0
    %679 = vmatprep.subr.bf16.mxu0 0
    %680 = vmatpush1.bf16.xpose.msra.mxu0 0
    %681 = vmatprep.subr.bf16.mxu0 0
    %682 = vmatpush1.bf16.xpose.msra.mxu0 0
    %683 = vmatprep.subr.bf16.mxu0 0
    %684 = vmatpush1.bf16.xpose.msra.mxu0 0
    %685 = vmatprep.subr.bf16.mxu0 0
    %686 = vmatpush1.bf16.xpose.msra.mxu0 0
    %687 = vmatprep.subr.bf16.mxu0 0
    %688 = vmatpush1.bf16.xpose.msra.mxu0 0
    %689 = vmatprep.subr.bf16.mxu0 0
    %690 = vmatpush1.bf16.xpose.msra.mxu0 0
    %691 = vmatprep.subr.bf16.mxu0 0
    %692 = vmatpush1.bf16.xpose.msra.mxu0 0
    %693 = vmatprep.subr.bf16.mxu0 0
    %694 = vmatpush1.bf16.xpose.msra.mxu0 %v677
    %695 = vmatprep.subr.bf16.mxu0 0
    %696 = vmatpush2.bf16.xpose.msra.mxu0 0
    %697 = vmatprep.subr.bf16.mxu0 0
    %698 = vmatpush2.bf16.xpose.msra.mxu0 0
    %699 = vmatprep.subr.bf16.mxu0 0
    %700 = vmatpush2.bf16.xpose.msra.mxu0 0
    %701 = vmatprep.subr.bf16.mxu0 0
    %702 = vmatpush2.bf16.xpose.msra.mxu0 0
    %703 = vmatprep.subr.bf16.mxu0 0
    %704 = vmatpush2.bf16.xpose.msra.mxu0 0
    %705 = vmatprep.subr.bf16.mxu0 0
    %706 = vmatpush2.bf16.xpose.msra.mxu0 0
    %707 = vmatprep.subr.bf16.mxu0 0
    %708 = vmatpush2.bf16.xpose.msra.mxu0 0
    %709 = vmatprep.subr.bf16.mxu0 0
    %710 = vmatpush2.bf16.xpose.msra.mxu0 0
    %711 = vmatprep.mubr.bf16.mxu0 0
    %712 = vmatmul.mubr.bf16.gmra.mxu0 %v588
    %v713 = vpop.f32.mrf.mxu0
    %v714 = vadd.f32 0.0, %v713
    %v715 = vpop.f32.mrf.mxu0
    %v716 = vpop.f32.mrf.mxu0
    %v717 = vpop.f32.mrf.mxu0
    %718 = vdwg.mxu0
    %v720 = vsel %vm159, %v403, 0
    %722 = vmatprep.subr.bf16.mxu0 0
    %723 = vmatpush1.bf16.xpose.msra.mxu0 0
    %724 = vmatprep.subr.bf16.mxu0 0
    %725 = vmatpush1.bf16.xpose.msra.mxu0 0
    %726 = vmatprep.subr.bf16.mxu0 0
    %727 = vmatpush1.bf16.xpose.msra.mxu0 0
    %728 = vmatprep.subr.bf16.mxu0 0
    %729 = vmatpush1.bf16.xpose.msra.mxu0 0
    %730 = vmatprep.subr.bf16.mxu0 0
    %731 = vmatpush1.bf16.xpose.msra.mxu0 0
    %732 = vmatprep.subr.bf16.mxu0 0
    %733 = vmatpush1.bf16.xpose.msra.mxu0 0
    %734 = vmatprep.subr.bf16.mxu0 0
    %735 = vmatpush1.bf16.xpose.msra.mxu0 0
    %736 = vmatprep.subr.bf16.mxu0 0
    %737 = vmatpush1.bf16.xpose.msra.mxu0 %v720
    %738 = vmatprep.subr.bf16.mxu0 0
    %739 = vmatpush2.bf16.xpose.msra.mxu0 0
    %740 = vmatprep.subr.bf16.mxu0 0
    %741 = vmatpush2.bf16.xpose.msra.mxu0 0
    %742 = vmatprep.subr.bf16.mxu0 0
    %743 = vmatpush2.bf16.xpose.msra.mxu0 0
    %744 = vmatprep.subr.bf16.mxu0 0
    %745 = vmatpush2.bf16.xpose.msra.mxu0 0
    %746 = vmatprep.subr.bf16.mxu0 0
    %747 = vmatpush2.bf16.xpose.msra.mxu0 0
    %748 = vmatprep.subr.bf16.mxu0 0
    %749 = vmatpush2.bf16.xpose.msra.mxu0 0
    %750 = vmatprep.subr.bf16.mxu0 0
    %751 = vmatpush2.bf16.xpose.msra.mxu0 0
    %752 = vmatprep.subr.bf16.mxu0 0
    %753 = vmatpush2.bf16.xpose.msra.mxu0 0
    %754 = vmatprep.mubr.bf16.mxu0 0
    %755 = vmatmul.mubr.bf16.gmra.mxu0 %v588
    %v756 = vpop.f32.mrf.mxu0
    %v757 = vadd.f32 0.0, %v756
    %v758 = vpop.f32.mrf.mxu0
    %v759 = vpop.f32.mrf.mxu0
    %v760 = vpop.f32.mrf.mxu0
    %761 = vdwg.mxu0
    %vm762 = vcmask 64512
    %v763 = vsel %vm762, %v453, -inf
    %764 = vmax.xlane.f32.xlu0 %v763
    %v765 = vpop.xlane.xlu0 %764
    %v766 = vsel %vm762, %v496, -inf
    %767 = vmax.xlane.f32.xlu0 %v766
    %v768 = vpop.xlane.xlu0 %767
    %v769 = vsel %vm762, %v539, -inf
    %770 = vmax.xlane.f32.xlu0 %v769
    %v771 = vpop.xlane.xlu0 %770
    %v772 = vsel %vm762, %v582, -inf
    %773 = vmax.xlane.f32.xlu0 %v772
    %v774 = vpop.xlane.xlu0 %773
    %v775 = vsel %vm762, %v628, -inf
    %776 = vmax.xlane.f32.xlu0 %v775
    %v777 = vpop.xlane.xlu0 %776
    %v778 = vsel %vm762, %v671, -inf
    %779 = vmax.xlane.f32.xlu0 %v778
    %v780 = vpop.xlane.xlu0 %779
    %v781 = vsel %vm762, %v714, -inf
    %782 = vmax.xlane.f32.xlu0 %v781
    %v783 = vpop.xlane.xlu0 %782
    %v784 = vsel %vm762, %v757, -inf
    %785 = vmax.xlane.f32.xlu0 %v784
    %v786 = vpop.xlane.xlu0 %785
    %v787 = vsub.f32 %v453, %v765
    %v788 = vsub.f32 %v496, %v768
    %v789 = vsub.f32 %v539, %v771
    %v790 = vsub.f32 %v582, %v774
    %v791 = vsub.f32 %v628, %v777
    %v792 = vsub.f32 %v671, %v780
    %v793 = vsub.f32 %v714, %v783
    %v794 = vsub.f32 %v757, %v786
    %v795 = vmul.f32 %v787, 1.442695
    %v796 = vpow.pop %v795
    %v797 = vmul.f32 %v788, 1.442695
    %v798 = vpow.pop %v797
    %v799 = vmul.f32 %v789, 1.442695
    %v800 = vpow.pop %v799
    %v801 = vmul.f32 %v790, 1.442695
    %v802 = vpow.pop %v801
    %v803 = vmul.f32 %v791, 1.442695
    %v804 = vpow.pop %v803
    %v805 = vmul.f32 %v792, 1.442695
    %v806 = vpow.pop %v805
    %v807 = vmul.f32 %v793, 1.442695
    %v808 = vpow.pop %v807
    %v809 = vmul.f32 %v794, 1.442695
    %v810 = vpow.pop %v809
    %v811 = vsel %vm762, %v796, 0.0
    %812 = vadd.xlane.f32.xlu0 %v811
    %v813 = vpop.xlane.xlu0 %812
    %v814 = vsel %vm762, %v798, 0.0
    %815 = vadd.xlane.f32.xlu0 %v814
    %v816 = vpop.xlane.xlu0 %815
    %v817 = vsel %vm762, %v800, 0.0
    %818 = vadd.xlane.f32.xlu0 %v817
    %v819 = vpop.xlane.xlu0 %818
    %v820 = vsel %vm762, %v802, 0.0
    %821 = vadd.xlane.f32.xlu0 %v820
    %v822 = vpop.xlane.xlu0 %821
    %v823 = vsel %vm762, %v804, 0.0
    %824 = vadd.xlane.f32.xlu0 %v823
    %v825 = vpop.xlane.xlu0 %824
    %v826 = vsel %vm762, %v806, 0.0
    %827 = vadd.xlane.f32.xlu0 %v826
    %v828 = vpop.xlane.xlu0 %827
    %v829 = vsel %vm762, %v808, 0.0
    %830 = vadd.xlane.f32.xlu0 %v829
    %v831 = vpop.xlane.xlu0 %830
    %v832 = vsel %vm762, %v810, 0.0
    %833 = vadd.xlane.f32.xlu0 %v832
    %v834 = vpop.xlane.xlu0 %833
    %v835 = vrcp.pop %v813
    %v836 = vrcp.pop %v816
    %v837 = vrcp.pop %v819
    %v838 = vrcp.pop %v822
    %v839 = vrcp.pop %v825
    %v840 = vrcp.pop %v828
    %v841 = vrcp.pop %v831
    %v842 = vrcp.pop %v834
    %v843 = vmul.f32 %v796, %v835
    %v844 = vmul.f32 %v798, %v836
    %v845 = vmul.f32 %v800, %v837
    %v846 = vmul.f32 %v802, %v838
    %v847 = vmul.f32 %v804, %v839
    %v848 = vmul.f32 %v806, %v840
    %v849 = vmul.f32 %v808, %v841
    %v850 = vmul.f32 %v810, %v842
    %v851 = vpack.c.bf16 %v843, %v843
    %v852 = vpack.c.bf16 %v844, %v844
    %v853 = vpack.c.bf16 %v845, %v845
    %v854 = vpack.c.bf16 %v846, %v846
    %v855 = vpack.c.bf16 %v847, %v847
    %v856 = vpack.c.bf16 %v848, %v848
    %v857 = vpack.c.bf16 %v849, %v849
    %v858 = vpack.c.bf16 %v850, %v850
    %v860 = vsel %vm762, %v851, 0
    %vm862 = vcmask 1043456
    %v864 = vsel %vm862, %v404, 0
    %866 = vmatprep.subr.bf16.mxu0 0
    %867 = vmatpush1.bf16.msra.mxu0 0
    %868 = vmatprep.subr.bf16.mxu0 0
    %869 = vmatpush1.bf16.msra.mxu0 0
    %870 = vmatprep.subr.bf16.mxu0 0
    %871 = vmatpush1.bf16.msra.mxu0 0
    %872 = vmatprep.subr.bf16.mxu0 0
    %873 = vmatpush1.bf16.msra.mxu0 0
    %874 = vmatprep.subr.bf16.mxu0 0
    %875 = vmatpush1.bf16.msra.mxu0 0
    %876 = vmatprep.subr.bf16.mxu0 0
    %877 = vmatpush1.bf16.msra.mxu0 0
    %878 = vmatprep.subr.bf16.mxu0 0
    %879 = vmatpush1.bf16.msra.mxu0 0
    %880 = vmatprep.subr.bf16.mxu0 0
    %881 = vmatpush1.bf16.msra.mxu0 %v864
    %882 = vmatprep.subr.bf16.mxu0 0
    %883 = vmatpush2.bf16.msra.mxu0 0
    %884 = vmatprep.subr.bf16.mxu0 0
    %885 = vmatpush2.bf16.msra.mxu0 0
    %886 = vmatprep.subr.bf16.mxu0 0
    %887 = vmatpush2.bf16.msra.mxu0 0
    %888 = vmatprep.subr.bf16.mxu0 0
    %889 = vmatpush2.bf16.msra.mxu0 0
    %890 = vmatprep.subr.bf16.mxu0 0
    %891 = vmatpush2.bf16.msra.mxu0 0
    %892 = vmatprep.subr.bf16.mxu0 0
    %893 = vmatpush2.bf16.msra.mxu0 0
    %894 = vmatprep.subr.bf16.mxu0 0
    %895 = vmatpush2.bf16.msra.mxu0 0
    %896 = vmatprep.subr.bf16.mxu0 0
    %897 = vmatpush2.bf16.msra.mxu0 0
    %898 = vmatprep.mubr.bf16.mxu0 0
    %899 = vmatmul.mubr.bf16.gmra.mxu0 %v860
    %v900 = vpop.f32.mrf.mxu0
    %v901 = vadd.f32 0.0, %v900
    %v902 = vpop.f32.mrf.mxu0
    %v903 = vpop.f32.mrf.mxu0
    %v904 = vpop.f32.mrf.mxu0
    %905 = vdwg.mxu0
    %v907 = vsel %vm762, %v852, 0
    %v910 = vsel %vm862, %v405, 0
    %912 = vmatprep.subr.bf16.mxu0 0
    %913 = vmatpush1.bf16.msra.mxu0 0
    %914 = vmatprep.subr.bf16.mxu0 0
    %915 = vmatpush1.bf16.msra.mxu0 0
    %916 = vmatprep.subr.bf16.mxu0 0
    %917 = vmatpush1.bf16.msra.mxu0 0
    %918 = vmatprep.subr.bf16.mxu0 0
    %919 = vmatpush1.bf16.msra.mxu0 0
    %920 = vmatprep.subr.bf16.mxu0 0
    %921 = vmatpush1.bf16.msra.mxu0 0
    %922 = vmatprep.subr.bf16.mxu0 0
    %923 = vmatpush1.bf16.msra.mxu0 0
    %924 = vmatprep.subr.bf16.mxu0 0
    %925 = vmatpush1.bf16.msra.mxu0 0
    %926 = vmatprep.subr.bf16.mxu0 0
    %927 = vmatpush1.bf16.msra.mxu0 %v910
    %928 = vmatprep.subr.bf16.mxu0 0
    %929 = vmatpush2.bf16.msra.mxu0 0
    %930 = vmatprep.subr.bf16.mxu0 0
    %931 = vmatpush2.bf16.msra.mxu0 0
    %932 = vmatprep.subr.bf16.mxu0 0
    %933 = vmatpush2.bf16.msra.mxu0 0
    %934 = vmatprep.subr.bf16.mxu0 0
    %935 = vmatpush2.bf16.msra.mxu0 0
    %936 = vmatprep.subr.bf16.mxu0 0
    %937 = vmatpush2.bf16.msra.mxu0 0
    %938 = vmatprep.subr.bf16.mxu0 0
    %939 = vmatpush2.bf16.msra.mxu0 0
    %940 = vmatprep.subr.bf16.mxu0 0
    %941 = vmatpush2.bf16.msra.mxu0 0
    %942 = vmatprep.subr.bf16.mxu0 0
    %943 = vmatpush2.bf16.msra.mxu0 0
    %944 = vmatprep.mubr.bf16.mxu0 0
    %945 = vmatmul.mubr.bf16.gmra.mxu0 %v907
    %v946 = vpop.f32.mrf.mxu0
    %v947 = vadd.f32 0.0, %v946
    %v948 = vpop.f32.mrf.mxu0
    %v949 = vpop.f32.mrf.mxu0
    %v950 = vpop.f32.mrf.mxu0
    %951 = vdwg.mxu0
    %v953 = vsel %vm762, %v853, 0
    %v956 = vsel %vm862, %v406, 0
    %958 = vmatprep.subr.bf16.mxu0 0
    %959 = vmatpush1.bf16.msra.mxu0 0
    %960 = vmatprep.subr.bf16.mxu0 0
    %961 = vmatpush1.bf16.msra.mxu0 0
    %962 = vmatprep.subr.bf16.mxu0 0
    %963 = vmatpush1.bf16.msra.mxu0 0
    %964 = vmatprep.subr.bf16.mxu0 0
    %965 = vmatpush1.bf16.msra.mxu0 0
    %966 = vmatprep.subr.bf16.mxu0 0
    %967 = vmatpush1.bf16.msra.mxu0 0
    %968 = vmatprep.subr.bf16.mxu0 0
    %969 = vmatpush1.bf16.msra.mxu0 0
    %970 = vmatprep.subr.bf16.mxu0 0
    %971 = vmatpush1.bf16.msra.mxu0 0
    %972 = vmatprep.subr.bf16.mxu0 0
    %973 = vmatpush1.bf16.msra.mxu0 %v956
    %974 = vmatprep.subr.bf16.mxu0 0
    %975 = vmatpush2.bf16.msra.mxu0 0
    %976 = vmatprep.subr.bf16.mxu0 0
    %977 = vmatpush2.bf16.msra.mxu0 0
    %978 = vmatprep.subr.bf16.mxu0 0
    %979 = vmatpush2.bf16.msra.mxu0 0
    %980 = vmatprep.subr.bf16.mxu0 0
    %981 = vmatpush2.bf16.msra.mxu0 0
    %982 = vmatprep.subr.bf16.mxu0 0
    %983 = vmatpush2.bf16.msra.mxu0 0
    %984 = vmatprep.subr.bf16.mxu0 0
    %985 = vmatpush2.bf16.msra.mxu0 0
    %986 = vmatprep.subr.bf16.mxu0 0
    %987 = vmatpush2.bf16.msra.mxu0 0
    %988 = vmatprep.subr.bf16.mxu0 0
    %989 = vmatpush2.bf16.msra.mxu0 0
    %990 = vmatprep.mubr.bf16.mxu0 0
    %991 = vmatmul.mubr.bf16.gmra.mxu0 %v953
    %v992 = vpop.f32.mrf.mxu0
    %v993 = vadd.f32 0.0, %v992
    %v994 = vpop.f32.mrf.mxu0
    %v995 = vpop.f32.mrf.mxu0
    %v996 = vpop.f32.mrf.mxu0
    %997 = vdwg.mxu0
    %v999 = vsel %vm762, %v854, 0
    %v1002 = vsel %vm862, %v407, 0
    %1004 = vmatprep.subr.bf16.mxu0 0
    %1005 = vmatpush1.bf16.msra.mxu0 0
    %1006 = vmatprep.subr.bf16.mxu0 0
    %1007 = vmatpush1.bf16.msra.mxu0 0
    %1008 = vmatprep.subr.bf16.mxu0 0
    %1009 = vmatpush1.bf16.msra.mxu0 0
    %1010 = vmatprep.subr.bf16.mxu0 0
    %1011 = vmatpush1.bf16.msra.mxu0 0
    %1012 = vmatprep.subr.bf16.mxu0 0
    %1013 = vmatpush1.bf16.msra.mxu0 0
    %1014 = vmatprep.subr.bf16.mxu0 0
    %1015 = vmatpush1.bf16.msra.mxu0 0
    %1016 = vmatprep.subr.bf16.mxu0 0
    %1017 = vmatpush1.bf16.msra.mxu0 0
    %1018 = vmatprep.subr.bf16.mxu0 0
    %1019 = vmatpush1.bf16.msra.mxu0 %v1002
    %1020 = vmatprep.subr.bf16.mxu0 0
    %1021 = vmatpush2.bf16.msra.mxu0 0
    %1022 = vmatprep.subr.bf16.mxu0 0
    %1023 = vmatpush2.bf16.msra.mxu0 0
    %1024 = vmatprep.subr.bf16.mxu0 0
    %1025 = vmatpush2.bf16.msra.mxu0 0
    %1026 = vmatprep.subr.bf16.mxu0 0
    %1027 = vmatpush2.bf16.msra.mxu0 0
    %1028 = vmatprep.subr.bf16.mxu0 0
    %1029 = vmatpush2.bf16.msra.mxu0 0
    %1030 = vmatprep.subr.bf16.mxu0 0
    %1031 = vmatpush2.bf16.msra.mxu0 0
    %1032 = vmatprep.subr.bf16.mxu0 0
    %1033 = vmatpush2.bf16.msra.mxu0 0
    %1034 = vmatprep.subr.bf16.mxu0 0
    %1035 = vmatpush2.bf16.msra.mxu0 0
    %1036 = vmatprep.mubr.bf16.mxu0 0
    %1037 = vmatmul.mubr.bf16.gmra.mxu0 %v999
    %v1038 = vpop.f32.mrf.mxu0
    %v1039 = vadd.f32 0.0, %v1038
    %v1040 = vpop.f32.mrf.mxu0
    %v1041 = vpop.f32.mrf.mxu0
    %v1042 = vpop.f32.mrf.mxu0
    %1043 = vdwg.mxu0
    %v1045 = vsel %vm762, %v855, 0
    %v1048 = vsel %vm862, %v408, 0
    %1050 = vmatprep.subr.bf16.mxu0 0
    %1051 = vmatpush1.bf16.msra.mxu0 0
    %1052 = vmatprep.subr.bf16.mxu0 0
    %1053 = vmatpush1.bf16.msra.mxu0 0
    %1054 = vmatprep.subr.bf16.mxu0 0
    %1055 = vmatpush1.bf16.msra.mxu0 0
    %1056 = vmatprep.subr.bf16.mxu0 0
    %1057 = vmatpush1.bf16.msra.mxu0 0
    %1058 = vmatprep.subr.bf16.mxu0 0
    %1059 = vmatpush1.bf16.msra.mxu0 0
    %1060 = vmatprep.subr.bf16.mxu0 0
    %1061 = vmatpush1.bf16.msra.mxu0 0
    %1062 = vmatprep.subr.bf16.mxu0 0
    %1063 = vmatpush1.bf16.msra.mxu0 0
    %1064 = vmatprep.subr.bf16.mxu0 0
    %1065 = vmatpush1.bf16.msra.mxu0 %v1048
    %1066 = vmatprep.subr.bf16.mxu0 0
    %1067 = vmatpush2.bf16.msra.mxu0 0
    %1068 = vmatprep.subr.bf16.mxu0 0
    %1069 = vmatpush2.bf16.msra.mxu0 0
    %1070 = vmatprep.subr.bf16.mxu0 0
    %1071 = vmatpush2.bf16.msra.mxu0 0
    %1072 = vmatprep.subr.bf16.mxu0 0
    %1073 = vmatpush2.bf16.msra.mxu0 0
    %1074 = vmatprep.subr.bf16.mxu0 0
    %1075 = vmatpush2.bf16.msra.mxu0 0
    %1076 = vmatprep.subr.bf16.mxu0 0
    %1077 = vmatpush2.bf16.msra.mxu0 0
    %1078 = vmatprep.subr.bf16.mxu0 0
    %1079 = vmatpush2.bf16.msra.mxu0 0
    %1080 = vmatprep.subr.bf16.mxu0 0
    %1081 = vmatpush2.bf16.msra.mxu0 0
    %1082 = vmatprep.mubr.bf16.mxu0 0
    %1083 = vmatmul.mubr.bf16.gmra.mxu0 %v1045
    %v1084 = vpop.f32.mrf.mxu0
    %v1085 = vadd.f32 0.0, %v1084
    %v1086 = vpop.f32.mrf.mxu0
    %v1087 = vpop.f32.mrf.mxu0
    %v1088 = vpop.f32.mrf.mxu0
    %1089 = vdwg.mxu0
    %v1091 = vsel %vm762, %v856, 0
    %v1094 = vsel %vm862, %v409, 0
    %1096 = vmatprep.subr.bf16.mxu0 0
    %1097 = vmatpush1.bf16.msra.mxu0 0
    %1098 = vmatprep.subr.bf16.mxu0 0
    %1099 = vmatpush1.bf16.msra.mxu0 0
    %1100 = vmatprep.subr.bf16.mxu0 0
    %1101 = vmatpush1.bf16.msra.mxu0 0
    %1102 = vmatprep.subr.bf16.mxu0 0
    %1103 = vmatpush1.bf16.msra.mxu0 0
    %1104 = vmatprep.subr.bf16.mxu0 0
    %1105 = vmatpush1.bf16.msra.mxu0 0
    %1106 = vmatprep.subr.bf16.mxu0 0
    %1107 = vmatpush1.bf16.msra.mxu0 0
    %1108 = vmatprep.subr.bf16.mxu0 0
    %1109 = vmatpush1.bf16.msra.mxu0 0
    %1110 = vmatprep.subr.bf16.mxu0 0
    %1111 = vmatpush1.bf16.msra.mxu0 %v1094
    %1112 = vmatprep.subr.bf16.mxu0 0
    %1113 = vmatpush2.bf16.msra.mxu0 0
    %1114 = vmatprep.subr.bf16.mxu0 0
    %1115 = vmatpush2.bf16.msra.mxu0 0
    %1116 = vmatprep.subr.bf16.mxu0 0
    %1117 = vmatpush2.bf16.msra.mxu0 0
    %1118 = vmatprep.subr.bf16.mxu0 0
    %1119 = vmatpush2.bf16.msra.mxu0 0
    %1120 = vmatprep.subr.bf16.mxu0 0
    %1121 = vmatpush2.bf16.msra.mxu0 0
    %1122 = vmatprep.subr.bf16.mxu0 0
    %1123 = vmatpush2.bf16.msra.mxu0 0
    %1124 = vmatprep.subr.bf16.mxu0 0
    %1125 = vmatpush2.bf16.msra.mxu0 0
    %1126 = vmatprep.subr.bf16.mxu0 0
    %1127 = vmatpush2.bf16.msra.mxu0 0
    %1128 = vmatprep.mubr.bf16.mxu0 0
    %1129 = vmatmul.mubr.bf16.gmra.mxu0 %v1091
    %v1130 = vpop.f32.mrf.mxu0
    %v1131 = vadd.f32 0.0, %v1130
    %v1132 = vpop.f32.mrf.mxu0
    %v1133 = vpop.f32.mrf.mxu0
    %v1134 = vpop.f32.mrf.mxu0
    %1135 = vdwg.mxu0
    %v1137 = vsel %vm762, %v857, 0
    %v1140 = vsel %vm862, %v410, 0
    %1142 = vmatprep.subr.bf16.mxu0 0
    %1143 = vmatpush1.bf16.msra.mxu0 0
    %1144 = vmatprep.subr.bf16.mxu0 0
    %1145 = vmatpush1.bf16.msra.mxu0 0
    %1146 = vmatprep.subr.bf16.mxu0 0
    %1147 = vmatpush1.bf16.msra.mxu0 0
    %1148 = vmatprep.subr.bf16.mxu0 0
    %1149 = vmatpush1.bf16.msra.mxu0 0
    %1150 = vmatprep.subr.bf16.mxu0 0
    %1151 = vmatpush1.bf16.msra.mxu0 0
    %1152 = vmatprep.subr.bf16.mxu0 0
    %1153 = vmatpush1.bf16.msra.mxu0 0
    %1154 = vmatprep.subr.bf16.mxu0 0
    %1155 = vmatpush1.bf16.msra.mxu0 0
    %1156 = vmatprep.subr.bf16.mxu0 0
    %1157 = vmatpush1.bf16.msra.mxu0 %v1140
    %1158 = vmatprep.subr.bf16.mxu0 0
    %1159 = vmatpush2.bf16.msra.mxu0 0
    %1160 = vmatprep.subr.bf16.mxu0 0
    %1161 = vmatpush2.bf16.msra.mxu0 0
    %1162 = vmatprep.subr.bf16.mxu0 0
    %1163 = vmatpush2.bf16.msra.mxu0 0
    %1164 = vmatprep.subr.bf16.mxu0 0
    %1165 = vmatpush2.bf16.msra.mxu0 0
    %1166 = vmatprep.subr.bf16.mxu0 0
    %1167 = vmatpush2.bf16.msra.mxu0 0
    %1168 = vmatprep.subr.bf16.mxu0 0
    %1169 = vmatpush2.bf16.msra.mxu0 0
    %1170 = vmatprep.subr.bf16.mxu0 0
    %1171 = vmatpush2.bf16.msra.mxu0 0
    %1172 = vmatprep.subr.bf16.mxu0 0
    %1173 = vmatpush2.bf16.msra.mxu0 0
    %1174 = vmatprep.mubr.bf16.mxu0 0
    %1175 = vmatmul.mubr.bf16.gmra.mxu0 %v1137
    %v1176 = vpop.f32.mrf.mxu0
    %v1177 = vadd.f32 0.0, %v1176
    %v1178 = vpop.f32.mrf.mxu0
    %v1179 = vpop.f32.mrf.mxu0
    %v1180 = vpop.f32.mrf.mxu0
    %1181 = vdwg.mxu0
    %v1183 = vsel %vm762, %v858, 0
    %v1186 = vsel %vm862, %v411, 0
    %1188 = vmatprep.subr.bf16.mxu0 0
    %1189 = vmatpush1.bf16.msra.mxu0 0
    %1190 = vmatprep.subr.bf16.mxu0 0
    %1191 = vmatpush1.bf16.msra.mxu0 0
    %1192 = vmatprep.subr.bf16.mxu0 0
    %1193 = vmatpush1.bf16.msra.mxu0 0
    %1194 = vmatprep.subr.bf16.mxu0 0
    %1195 = vmatpush1.bf16.msra.mxu0 0
    %1196 = vmatprep.subr.bf16.mxu0 0
    %1197 = vmatpush1.bf16.msra.mxu0 0
    %1198 = vmatprep.subr.bf16.mxu0 0
    %1199 = vmatpush1.bf16.msra.mxu0 0
    %1200 = vmatprep.subr.bf16.mxu0 0
    %1201 = vmatpush1.bf16.msra.mxu0 0
    %1202 = vmatprep.subr.bf16.mxu0 0
    %1203 = vmatpush1.bf16.msra.mxu0 %v1186
    %1204 = vmatprep.subr.bf16.mxu0 0
    %1205 = vmatpush2.bf16.msra.mxu0 0
    %1206 = vmatprep.subr.bf16.mxu0 0
    %1207 = vmatpush2.bf16.msra.mxu0 0
    %1208 = vmatprep.subr.bf16.mxu0 0
    %1209 = vmatpush2.bf16.msra.mxu0 0
    %1210 = vmatprep.subr.bf16.mxu0 0
    %1211 = vmatpush2.bf16.msra.mxu0 0
    %1212 = vmatprep.subr.bf16.mxu0 0
    %1213 = vmatpush2.bf16.msra.mxu0 0
    %1214 = vmatprep.subr.bf16.mxu0 0
    %1215 = vmatpush2.bf16.msra.mxu0 0
    %1216 = vmatprep.subr.bf16.mxu0 0
    %1217 = vmatpush2.bf16.msra.mxu0 0
    %1218 = vmatprep.subr.bf16.mxu0 0
    %1219 = vmatpush2.bf16.msra.mxu0 0
    %1220 = vmatprep.mubr.bf16.mxu0 0
    %1221 = vmatmul.mubr.bf16.gmra.mxu0 %v1183
    %v1222 = vpop.f32.mrf.mxu0
    %v1223 = vadd.f32 0.0, %v1222
    %v1224 = vpop.f32.mrf.mxu0
    %v1225 = vpop.f32.mrf.mxu0
    %v1226 = vpop.f32.mrf.mxu0
    %1227 = vdwg.mxu0
    %v1228 = vsel %vm159, %v901, 0.0
    %v1229 = vsel %vm159, %v947, 0.0
    %v1230 = vadd.f32 %v1228, %v1229
    %v1231 = vsel %vm159, %v993, 0.0
    %v1232 = vadd.f32 %v1230, %v1231
    %v1233 = vsel %vm159, %v1039, 0.0
    %v1234 = vadd.f32 %v1232, %v1233
    %v1235 = vsel %vm159, %v1085, 0.0
    %v1236 = vsel %vm159, %v1131, 0.0
    %v1237 = vadd.f32 %v1235, %v1236
    %v1238 = vsel %vm159, %v1177, 0.0
    %v1239 = vadd.f32 %v1237, %v1238
    %v1240 = vsel %vm159, %v1223, 0.0
    %v1241 = vadd.f32 %v1239, %v1240
    %v1242 = vpack.c.bf16 %v1241, %v1234
    %v1243 = vld [vmem:[%s6] sm:$0xf]
    %v1244 = vld [vmem:[%s6 + $0x4] sm:$0xf]
    %v1245 = vld [vmem:[%s6 + $0x8] sm:$0xf]
    %v1246 = vld [vmem:[%s6 + $0xc] sm:$0xf]
    %v1247 = vlaneseq
    %v1248 = vshrl.u32 %v1247, 7
    %v1249 = vsub.s32 3, %v1248
    %v1250 = vrot.slane %v127, %v1249
    %v1255 = vunpack.c.l.b16 %v1243
    %v1256 = vunpack.c.l.b16 %v1244
    %v1257 = vunpack.c.l.b16 %v1245
    %v1258 = vunpack.c.l.b16 %v1246
    %v1259 = vpack.c.b16 %v1256, %v1255
    %v1260 = vpack.c.b16 %v1258, %v1257
    %v1264 = vsel %vm159, %v1242, 0
    %1266 = vmatprep.subr.bf16.mxu0 0
    %1267 = vmatpush1.bf16.msra.mxu0 0
    %1268 = vmatprep.subr.bf16.mxu0 0
    %1269 = vmatpush1.bf16.msra.mxu0 0
    %1270 = vmatprep.subr.bf16.mxu0 0
    %1271 = vmatpush1.bf16.msra.mxu0 0
    %1272 = vmatprep.subr.bf16.mxu0 0
    %1273 = vmatpush1.bf16.msra.mxu0 0
    %1274 = vmatprep.subr.bf16.mxu0 0
    %1275 = vmatpush1.bf16.msra.mxu0 0
    %1276 = vmatprep.subr.bf16.mxu0 0
    %1277 = vmatpush1.bf16.msra.mxu0 0
    %1278 = vmatprep.subr.bf16.mxu0 0
    %1279 = vmatpush1.bf16.msra.mxu0 %v1260
    %1280 = vmatprep.subr.bf16.mxu0 0
    %1281 = vmatpush1.bf16.msra.mxu0 %v1259
    %1282 = vmatprep.subr.bf16.mxu0 0
    %1283 = vmatpush2.bf16.msra.mxu0 0
    %1284 = vmatprep.subr.bf16.mxu0 0
    %1285 = vmatpush2.bf16.msra.mxu0 0
    %1286 = vmatprep.subr.bf16.mxu0 0
    %1287 = vmatpush2.bf16.msra.mxu0 0
    %1288 = vmatprep.subr.bf16.mxu0 0
    %1289 = vmatpush2.bf16.msra.mxu0 0
    %1290 = vmatprep.subr.bf16.mxu0 0
    %1291 = vmatpush2.bf16.msra.mxu0 0
    %1292 = vmatprep.subr.bf16.mxu0 0
    %1293 = vmatpush2.bf16.msra.mxu0 0
    %1294 = vmatprep.subr.bf16.mxu0 0
    %1295 = vmatpush2.bf16.msra.mxu0 0
    %1296 = vmatprep.subr.bf16.mxu0 0
    %1297 = vmatpush2.bf16.msra.mxu0 0
    %1298 = vmatprep.mubr.bf16.mxu0 0
    %1299 = vmatmul.mubr.bf16.gmra.mxu0 %v1264
    %v1300 = vpop.f32.mrf.mxu0
    %v1301 = vadd.f32 %v1250, %v1300
    %v1302 = vpop.f32.mrf.mxu0
    %v1303 = vpop.f32.mrf.mxu0
    %v1304 = vadd.f32 %v1250, %v1303
    %v1305 = vpop.f32.mrf.mxu0
    %1306 = vdwg.mxu0
    %1307 = vst.msk [vmem:[#allocation14] sm:$0xff] %vm159, %v1301
    %1308 = vst.msk [vmem:[#allocation14 + $0x8] sm:$0xff] %vm159, %v1304
    // Predicated region
    $region66: #{tpu_custom_call.1} parent=1 // pred_check
      _
    $region67: #{tpu_custom_call.1} parent=1 // pred_check_branch
      %1310 = sbr.rel (0) target = $region69
    $region68: #{tpu_custom_call.1} parent=1 // pred_region
      %s1312 = ssub.s32 256, 256
      %1313 = vsyncadd [#allocation4], %s1312
      %s1314 = sshll.u32 [#allocation14], 4
      %s1315 = int_to_ptr.vmem [resolvable:$true] %s1314
      %1320 = dma.vmem_to_hbm [thread:$0]  %s1315, 256, %s9, [#allocation4], 128, 128, 8
    $region69: #{tpu_custom_call.1} parent=1 // pred_fallthru
      _
    // Predicated region
    $region70: #{tpu_custom_call.1} parent=1 // pred_check
      _
    $region71: #{tpu_custom_call.1} parent=1 // pred_check_branch
      %1322 = sbr.rel (0) target = $region73
    $region72: #{tpu_custom_call.1} parent=1 // pred_region
      %1323 = dma.done [#allocation4], 256
    $region73: #{tpu_custom_call.1} parent=1 // pred_fallthru
      _
    %1324 = vsyncpa [#allocation3], 1
    %1325 = vsyncpa [#allocation6], 1
    %1326 = vsyncpa [#allocation9], 1
    %1327 = vsyncpa [#allocation12], 1
    %1328 = vsyncpa [#allocation4], 1

</llo_original>
